<compile_context>
chip_gen: v7x
topology: tpu7x:2x2x1
jax: 0.10.0
libtpu: 0.0.40
codegen_flags: <defaults>
</compile_context>

<pallas_src>
import jax
import jax.numpy as jnp
import numpy as np
from jax.experimental import pallas as pl
from jax.experimental.pallas import tpu as pltpu

# ---------------------------------------------------------------------------
# Problem sizes (small, consistent with the module)
# ---------------------------------------------------------------------------
B = 2             # batch
L = 8             # sequence length
STATE_DIM = 32    # state_dim (TrajEncoder output dim)
STATE_PAD = 128   # state lanes padded to a full vreg width
FEATURE_DIM = 128       # feature_dim
RESIDUAL_FF_DIM = 256   # residual_ff_dim
N_RES_BLOCKS = 2        # residual_blocks
NUM_GAMMAS = 4          # len(gammas)
ACTION_DIM = 8          # discrete=True -> policy_dist.input_dimension == action_dim
DIST_INPUT_DIM = ACTION_DIM
OUT_DIM = NUM_GAMMAS * DIST_INPUT_DIM   # 32
OUT_PAD = 128                            # lane-dense padded output width

MAX_TM = 512         # row-tile cap for large B*L (few steps; VMEM stays small)
LEAKY_SLOPE = 0.01   # F.leaky_relu default
LN_EPS = 1e-5        # nn.LayerNorm default

# --- static row offsets inside the packed parameter arrays -----------------
# w128 : (896, 128) bf16
_W_IN1_OFF = 0                                   # rows [0, 128)
_W_IN2_OFF = STATE_PAD                           # rows [128, 256)
_W_OUT_OFF = STATE_PAD + FEATURE_DIM             # rows [256, 384)
_WB2_OFF = STATE_PAD + 2 * FEATURE_DIM           # block b: [384 + b*256, ...)
# w256 : (256, 256) bf16
_WB1_OFF = 0                                     # block b: [b*128, (b+1)*128)
# vec128 : (16, 128) f32 rows
_B_IN1_ROW = 0
_B_IN2_ROW = 1
_B_OUT_ROW = 2
_BLK128_ROW = 3                                  # block b: rows 3+3b : bb2, g2, be2
# vec256 : (8, 256) f32 rows
_BLK256_ROW = 0                                  # block b: rows 3b : bb1, g1, be1


def _round_up(x, m):
    return ((x + m - 1) // m) * m


# ---------------------------------------------------------------------------
# Pallas kernel: the whole actor-head hot path for one row tile
# ---------------------------------------------------------------------------
def residual_actor_kernel(
    state_ref,        # (TM, STATE_PAD)  f32  (lanes >= STATE_DIM are zero)
    w128_ref,         # (896, 128)       bf16 packed weights (128-lane outputs)
    w256_ref,         # (256, 256)       bf16 packed weights (256-lane outputs)
    vec128_ref,       # (16, 128)        f32  packed biases / LN affine (128 wide)
    vec256_ref,       # (8, 256)         f32  packed biases / LN affine (256 wide)
    out_ref,          # (TM, OUT_PAD)    f32  (lanes >= OUT_DIM are zero)
):
    def leaky_relu(v):
        return jnp.where(v >= 0, v, LEAKY_SLOPE * v)

    def layer_norm(v, gamma, beta):
        # var = E[x^2] - mu^2: the two cross-lane reductions have no serial
        # dependency, so both XLU passes can overlap.
        inv_n = 1.0 / v.shape[-1]
        mu = jnp.sum(v, axis=-1, keepdims=True) * inv_n
        ex2 = jnp.sum(v * v, axis=-1, keepdims=True) * inv_n
        var = jnp.maximum(ex2 - mu * mu, 0.0)
        return (v - mu) * jax.lax.rsqrt(var + LN_EPS) * gamma + beta

    def mm(act_bf16, w_bf16):
        # bf16 x bf16 MXU matmul with f32 accumulation.
        return jnp.dot(act_bf16, w_bf16, preferred_element_type=jnp.float32)

    # ---- static slices of the packed parameters (free; tile-aligned offsets) ----
    w_in1 = w128_ref[_W_IN1_OFF:_W_IN1_OFF + STATE_PAD, :]
    w_in2 = w128_ref[_W_IN2_OFF:_W_IN2_OFF + FEATURE_DIM, :]
    w_out = w128_ref[_W_OUT_OFF:_W_OUT_OFF + FEATURE_DIM, :]
    b_in1 = vec128_ref[_B_IN1_ROW:_B_IN1_ROW + 1, :]
    b_in2 = vec128_ref[_B_IN2_ROW:_B_IN2_ROW + 1, :]
    b_out = vec128_ref[_B_OUT_ROW:_B_OUT_ROW + 1, :]

    # ---- amago MLP(d_inp=D, d_hidden=F, n_layers=1, d_output=F); dropout_p=0 ----
    x_bf = state_ref[...].astype(jnp.bfloat16)           # one cast per matmul input
    h = leaky_relu(mm(x_bf, w_in1) + b_in1)               # f32
    h = mm(h.astype(jnp.bfloat16), w_in2) + b_in2          # f32

    # ---- residual blocks: static Python unroll (NB=2) ----
    for blk in range(N_RES_BLOCKS):
        wb1 = w256_ref[_WB1_OFF + blk * FEATURE_DIM:
                       _WB1_OFF + (blk + 1) * FEATURE_DIM, :]
        wb2 = w128_ref[_WB2_OFF + blk * RESIDUAL_FF_DIM:
                       _WB2_OFF + (blk + 1) * RESIDUAL_FF_DIM, :]
        r2 = _BLK256_ROW + 3 * blk
        bb1 = vec256_ref[r2:r2 + 1, :]
        g1 = vec256_ref[r2 + 1:r2 + 2, :]
        be1 = vec256_ref[r2 + 2:r2 + 3, :]
        r1 = _BLK128_ROW + 3 * blk
        bb2 = vec128_ref[r1:r1 + 1, :]
        g2 = vec128_ref[r1 + 1:r1 + 2, :]
        be2 = vec128_ref[r1 + 2:r1 + 3, :]

        y = mm(h.astype(jnp.bfloat16), wb1) + bb1
        y = leaky_relu(layer_norm(y, g1, be1))
        y = mm(y.astype(jnp.bfloat16), wb2) + bb2
        y = layer_norm(y, g2, be2)
        h = h + y                                           # residual accumulate, f32

    # ---- output projection; lane-dense (128-wide) unmasked store ----
    out_ref[...] = mm(h.astype(jnp.bfloat16), w_out) + b_out


# ---------------------------------------------------------------------------
# One-time parameter packing (outside the jitted hot path)
# ---------------------------------------------------------------------------
def prepare_params(p):
    """Pack raw f32 module params into the kernel's 4 fused arrays (done once)."""
    w_in1_p = jnp.pad(p["w_in1"], ((0, STATE_PAD - STATE_DIM), (0, 0)))   # zero rows -> padded input lanes are inert
    w_out_p = jnp.pad(p["w_out"], ((0, 0), (0, OUT_PAD - OUT_DIM)))
    b_out_p = jnp.pad(p["b_out"], ((0, 0), (0, OUT_PAD - OUT_DIM)))

    w128 = jnp.concatenate(
        [w_in1_p, p["w_in2"], w_out_p] + [p["wb2"][b] for b in range(N_RES_BLOCKS)],
        axis=0,
    ).astype(jnp.bfloat16)                                   # (896, 128)
    w256 = jnp.concatenate(
        [p["wb1"][b] for b in range(N_RES_BLOCKS)], axis=0
    ).astype(jnp.bfloat16)                                   # (256, 256)

    vec128_rows = [p["b_in1"], p["b_in2"], b_out_p]
    for b in range(N_RES_BLOCKS):
        vec128_rows += [p["bb2"][b], p["g2"][b], p["be2"][b]]
    vec128 = jnp.concatenate(vec128_rows, axis=0)            # (9, 128)
    vec128 = jnp.pad(vec128, ((0, _round_up(vec128.shape[0], 8) - vec128.shape[0]), (0, 0)))

    vec256_rows = []
    for b in range(N_RES_BLOCKS):
        vec256_rows += [p["bb1"][b], p["g1"][b], p["be1"][b]]
    vec256 = jnp.concatenate(vec256_rows, axis=0)            # (6, 256)
    vec256 = jnp.pad(vec256, ((0, _round_up(vec256.shape[0], 8) - vec256.shape[0]), (0, 0)))

    return {"w128": w128, "w256": w256, "vec128": vec128, "vec256": vec256}


# ---------------------------------------------------------------------------
# Jitted forward wrapper
# ---------------------------------------------------------------------------
def _full_spec(shape):
    ndim = len(shape)
    return pl.BlockSpec(shape, lambda i, _nd=ndim: (0,) * _nd)


@jax.jit
def residual_actor_forward(state, kp):
    """state: (B, L, STATE_DIM) -> dist params (B, L, NUM_GAMMAS, DIST_INPUT_DIM)."""
    b, l, d = state.shape
    m = b * l

    # Row-tile choice (static, from shapes):
    #   * small M: one grid step (latency-bound; no pipeline overhead)
    #   * M >= 64: at least 2 steps so "parallel" can use both v7x TensorCores,
    #     capped at MAX_TM so single-TC v5e/v6e keep few, large steps.
    m8 = _round_up(max(m, 8), 8)
    if m8 < 64:
        tm = m8
    else:
        tm = min(MAX_TM, _round_up((m8 + 1) // 2, 8))
    m_pad = _round_up(m, tm)
    grid = (m_pad // tm,)

    x2d = state.reshape(m, d)
    # pad rows to the tile and lanes to 128 (lane-dense input block, full-K MXU pass)
    x2d = jnp.pad(x2d, ((0, m_pad - m), (0, STATE_PAD - d)))

    out2d = pl.pallas_call(
        residual_actor_kernel,
        out_shape=jax.ShapeDtypeStruct((m_pad, OUT_PAD), jnp.float32),
        grid_spec=pltpu.PrefetchScalarGridSpec(
            num_scalar_prefetch=0,
            grid=grid,
            in_specs=[
                pl.BlockSpec((tm, STATE_PAD), lambda i: (i, 0)),
                _full_spec(kp["w128"].shape),
                _full_spec(kp["w256"].shape),
                _full_spec(kp["vec128"].shape),
                _full_spec(kp["vec256"].shape),
            ],
            out_specs=pl.BlockSpec((tm, OUT_PAD), lambda i: (i, 0)),
        ),
        # Rows are independent (no cross-step accumulator) -> shardable on v7x's 2 TCs.
        compiler_params=pltpu.CompilerParams(dimension_semantics=("parallel",)),
    )(x2d, kp["w128"], kp["w256"], kp["vec128"], kp["vec256"])

    out2d = out2d[:m, :OUT_DIM]
    # rearrange(out, 'b l (g f) -> b l g f', g=num_gammas)
    return out2d.reshape(b, l, NUM_GAMMAS, DIST_INPUT_DIM)


# ---------------------------------------------------------------------------
# Deterministic parameter construction (PyTorch-default-style init, synthetic)
# ---------------------------------------------------------------------------
def init_linear(key, fan_in, fan_out):
    kw, kb = jax.random.split(key)
    lim = 1.0 / np.sqrt(fan_in)
    w = jax.random.uniform(kw, (fan_in, fan_out), minval=-lim, maxval=lim, dtype=jnp.float32)
    bias = jax.random.uniform(kb, (1, fan_out), minval=-lim, maxval=lim, dtype=jnp.float32)
    return w, bias


def make_params(key):
    keys = jax.random.split(key, 3 + 2 * N_RES_BLOCKS)
    p = {}
    p["w_in1"], p["b_in1"] = init_linear(keys[0], STATE_DIM, FEATURE_DIM)
    p["w_in2"], p["b_in2"] = init_linear(keys[1], FEATURE_DIM, FEATURE_DIM)

    wb1, bb1, g1, be1, wb2, bb2, g2, be2 = [], [], [], [], [], [], [], []
    for blk in range(N_RES_BLOCKS):
        w, bias = init_linear(keys[2 + 2 * blk], FEATURE_DIM, RESIDUAL_FF_DIM)
        wb1.append(w); bb1.append(bias)
        g1.append(jnp.ones((1, RESIDUAL_FF_DIM), jnp.float32))    # nn.LayerNorm default weight
        be1.append(jnp.zeros((1, RESIDUAL_FF_DIM), jnp.float32))  # nn.LayerNorm default bias
        w, bias = init_linear(keys[3 + 2 * blk], RESIDUAL_FF_DIM, FEATURE_DIM)
        wb2.append(w); bb2.append(bias)
        g2.append(jnp.ones((1, FEATURE_DIM), jnp.float32))
        be2.append(jnp.zeros((1, FEATURE_DIM), jnp.float32))

    p["wb1"] = jnp.stack(wb1); p["bb1"] = jnp.stack(bb1)
    p["g1"] = jnp.stack(g1);   p["be1"] = jnp.stack(be1)
    p["wb2"] = jnp.stack(wb2); p["bb2"] = jnp.stack(bb2)
    p["g2"] = jnp.stack(g2);   p["be2"] = jnp.stack(be2)

    p["w_out"], p["b_out"] = init_linear(keys[-1], FEATURE_DIM, OUT_DIM)
    return p


# ---------------------------------------------------------------------------
# Pure-JAX reference (mirrors the PyTorch module); weight_dtype=bf16 mirrors the
# kernel's mixed-precision matmuls with f32 accumulation.
# ---------------------------------------------------------------------------
def reference_forward(state, p, weight_dtype=jnp.float32):
    def leaky_relu(v):
        return jnp.where(v >= 0, v, LEAKY_SLOPE * v)

    def layer_norm(v, g, beta):
        mu = jnp.mean(v, axis=-1, keepdims=True)
        var = jnp.mean((v - mu) ** 2, axis=-1, keepdims=True)
        return (v - mu) * jax.lax.rsqrt(var + LN_EPS) * g + beta

    def mm(a, w):
        if weight_dtype == jnp.bfloat16:
            return jnp.dot(a.astype(jnp.bfloat16), w.astype(jnp.bfloat16),
                           preferred_element_type=jnp.float32)
        return jnp.dot(a, w, preferred_element_type=jnp.float32)

    bsz, seq, _ = state.shape
    x = state.reshape(-1, state.shape[-1])
    x = leaky_relu(mm(x, p["w_in1"]) + p["b_in1"])
    x = mm(x, p["w_in2"]) + p["b_in2"]
    for blk in range(N_RES_BLOCKS):
        y = mm(x, p["wb1"][blk]) + p["bb1"][blk]
        y = layer_norm(y, p["g1"][blk], p["be1"][blk])
        y = leaky_relu(y)
        y = mm(y, p["wb2"][blk]) + p["bb2"][blk]
        y = layer_norm(y, p["g2"][blk], p["be2"][blk])
        x = x + y
    out = mm(x, p["w_out"]) + p["b_out"]
    return out.reshape(bsz, seq, NUM_GAMMAS, DIST_INPUT_DIM)


if __name__ == "__main__":
    key = jax.random.PRNGKey(0)
    k_state, k_params = jax.random.split(key)

    state = jax.random.normal(k_state, (B, L, STATE_DIM), dtype=jnp.float32)
    params = make_params(k_params)

    # One-time packing (bf16 casts, padding, bias fusion) outside the jitted path.
    kernel_params = jax.tree_util.tree_map(jax.block_until_ready, prepare_params(params))

    dist_params = residual_actor_forward(state, kernel_params)
    dist_params = jax.block_until_ready(dist_params)

    assert dist_params.shape == (B, L, NUM_GAMMAS, DIST_INPUT_DIM), dist_params.shape

    # Tight check against a reference that uses the same bf16-weight / f32-accumulate math.
    ref_mixed = jax.block_until_ready(reference_forward(state, params, jnp.bfloat16))
    np.testing.assert_allclose(
        np.asarray(dist_params), np.asarray(ref_mixed), rtol=5e-3, atol=5e-3
    )

    # Loose sanity check against the full-f32 module reference (bf16 roundoff budget).
    ref_f32 = jax.block_until_ready(reference_forward(state, params, jnp.float32))
    np.testing.assert_allclose(
        np.asarray(dist_params), np.asarray(ref_f32), rtol=5e-2, atol=5e-2
    )

    print("KERNEL_OK")
</pallas_src>

<mosaic_0001>
module attributes {stable_mosaic.version = 11 : i64} {
  func.func @residual_actor_kernel(%arg0: i32, %arg1: memref<16x128xf32, #tpu.memory_space<vmem>>, %arg2: memref<896x128xbf16, #tpu.memory_space<vmem>>, %arg3: memref<256x256xbf16, #tpu.memory_space<vmem>>, %arg4: memref<16x128xf32, #tpu.memory_space<vmem>>, %arg5: memref<8x256xf32, #tpu.memory_space<vmem>>, %arg6: memref<16x128xf32, #tpu.memory_space<vmem>>) attributes {dimension_semantics = [#tpu.dimension_semantics<parallel>], iteration_bounds = array<i64: 1>, scalar_prefetch = 0 : i64, scratch_operands = 0 : i64, tpu.core_type = #tpu.core_type<tc>, window_params = [{transform_indices = @transform_0, window_bounds = array<i64: 16, 128>}, {pipeline_mode = #tpu.pipeline_mode<synchronous>, transform_indices = @transform_1, window_bounds = array<i64: 896, 128>}, {pipeline_mode = #tpu.pipeline_mode<synchronous>, transform_indices = @transform_2, window_bounds = array<i64: 256, 256>}, {pipeline_mode = #tpu.pipeline_mode<synchronous>, transform_indices = @transform_3, window_bounds = array<i64: 16, 128>}, {pipeline_mode = #tpu.pipeline_mode<synchronous>, transform_indices = @transform_4, window_bounds = array<i64: 8, 256>}, {transform_indices = @transform_5, window_bounds = array<i64: 16, 128>}]} {
    %c0 = arith.constant 0 : index
    %c0_0 = arith.constant 0 : index
    %0 = vector.load %arg2[%c0, %c0_0] : memref<896x128xbf16, #tpu.memory_space<vmem>>, vector<128x128xbf16>
    %c128 = arith.constant 128 : index
    %c0_1 = arith.constant 0 : index
    %1 = vector.load %arg2[%c128, %c0_1] : memref<896x128xbf16, #tpu.memory_space<vmem>>, vector<128x128xbf16>
    %c256 = arith.constant 256 : index
    %c0_2 = arith.constant 0 : index
    %2 = vector.load %arg2[%c256, %c0_2] : memref<896x128xbf16, #tpu.memory_space<vmem>>, vector<128x128xbf16>
    %c0_3 = arith.constant 0 : index
    %c0_4 = arith.constant 0 : index
    %3 = vector.load %arg4[%c0_3, %c0_4] : memref<16x128xf32, #tpu.memory_space<vmem>>, vector<1x128xf32>
    %c1 = arith.constant 1 : index
    %c0_5 = arith.constant 0 : index
    %4 = vector.load %arg4[%c1, %c0_5] : memref<16x128xf32, #tpu.memory_space<vmem>>, vector<1x128xf32>
    %c2 = arith.constant 2 : index
    %c0_6 = arith.constant 0 : index
    %5 = vector.load %arg4[%c2, %c0_6] : memref<16x128xf32, #tpu.memory_space<vmem>>, vector<1x128xf32>
    %c0_7 = arith.constant 0 : index
    %c0_8 = arith.constant 0 : index
    %6 = vector.load %arg1[%c0_7, %c0_8] : memref<16x128xf32, #tpu.memory_space<vmem>>, vector<16x128xf32>
    %7 = arith.truncf %6 : vector<16x128xf32> to vector<16x128xbf16>
    %cst = arith.constant dense<0.000000e+00> : vector<16x128xf32>
    %8 = tpu.matmul %7, %0, %cst {dimension_numbers = #tpu.dot_dimension_numbers<[1], [0], [0], [1], [0, 0, 1, 1], [], []>} : vector<16x128xbf16>, vector<128x128xbf16>, vector<16x128xf32> -> vector<16x128xf32>
    %9 = vector.broadcast %3 : vector<1x128xf32> to vector<16x128xf32>
    %10 = arith.addf %8, %9 : vector<16x128xf32>
    %cst_9 = arith.constant 0.000000e+00 : f32
    %11 = vector.broadcast %cst_9 : f32 to vector<16x128xf32>
    %12 = arith.cmpf oge, %10, %11 : vector<16x128xf32>
    %cst_10 = arith.constant 0.00999999977 : f32
    %13 = vector.broadcast %cst_10 : f32 to vector<16x128xf32>
    %14 = arith.mulf %13, %10 : vector<16x128xf32>
    %15 = arith.select %12, %10, %14 : vector<16x128xi1>, vector<16x128xf32>
    %16 = arith.truncf %15 : vector<16x128xf32> to vector<16x128xbf16>
    %cst_11 = arith.constant dense<0.000000e+00> : vector<16x128xf32>
    %17 = tpu.matmul %16, %1, %cst_11 {dimension_numbers = #tpu.dot_dimension_numbers<[1], [0], [0], [1], [0, 0, 1, 1], [], []>} : vector<16x128xbf16>, vector<128x128xbf16>, vector<16x128xf32> -> vector<16x128xf32>
    %18 = vector.broadcast %4 : vector<1x128xf32> to vector<16x128xf32>
    %19 = arith.addf %17, %18 : vector<16x128xf32>
    %c0_12 = arith.constant 0 : index
    %c0_13 = arith.constant 0 : index
    %20 = vector.load %arg3[%c0_12, %c0_13] : memref<256x256xbf16, #tpu.memory_space<vmem>>, vector<128x256xbf16>
    %c384 = arith.constant 384 : index
    %c0_14 = arith.constant 0 : index
    %21 = vector.load %arg2[%c384, %c0_14] : memref<896x128xbf16, #tpu.memory_space<vmem>>, vector<256x128xbf16>
    %c0_15 = arith.constant 0 : index
    %c0_16 = arith.constant 0 : index
    %22 = vector.load %arg5[%c0_15, %c0_16] : memref<8x256xf32, #tpu.memory_space<vmem>>, vector<1x256xf32>
    %c1_17 = arith.constant 1 : index
    %c0_18 = arith.constant 0 : index
    %23 = vector.load %arg5[%c1_17, %c0_18] : memref<8x256xf32, #tpu.memory_space<vmem>>, vector<1x256xf32>
    %c2_19 = arith.constant 2 : index
    %c0_20 = arith.constant 0 : index
    %24 = vector.load %arg5[%c2_19, %c0_20] : memref<8x256xf32, #tpu.memory_space<vmem>>, vector<1x256xf32>
    %c3 = arith.constant 3 : index
    %c0_21 = arith.constant 0 : index
    %25 = vector.load %arg4[%c3, %c0_21] : memref<16x128xf32, #tpu.memory_space<vmem>>, vector<1x128xf32>
    %c4 = arith.constant 4 : index
    %c0_22 = arith.constant 0 : index
    %26 = vector.load %arg4[%c4, %c0_22] : memref<16x128xf32, #tpu.memory_space<vmem>>, vector<1x128xf32>
    %c5 = arith.constant 5 : index
    %c0_23 = arith.constant 0 : index
    %27 = vector.load %arg4[%c5, %c0_23] : memref<16x128xf32, #tpu.memory_space<vmem>>, vector<1x128xf32>
    %28 = arith.truncf %19 : vector<16x128xf32> to vector<16x128xbf16>
    %cst_24 = arith.constant dense<0.000000e+00> : vector<16x256xf32>
    %29 = tpu.matmul %28, %20, %cst_24 {dimension_numbers = #tpu.dot_dimension_numbers<[1], [0], [0], [1], [0, 0, 1, 1], [], []>} : vector<16x128xbf16>, vector<128x256xbf16>, vector<16x256xf32> -> vector<16x256xf32>
    %30 = vector.broadcast %22 : vector<1x256xf32> to vector<16x256xf32>
    %31 = arith.addf %29, %30 : vector<16x256xf32>
    %cst_25 = arith.constant dense<0.000000e+00> : vector<16xf32>
    %32 = vector.multi_reduction <add>, %31, %cst_25 [1] : vector<16x256xf32> to vector<16xf32>
    %33 = vector.shape_cast %32 : vector<16xf32> to vector<16x1xf32>
    %cst_26 = arith.constant 3.906250e-03 : f32
    %34 = vector.broadcast %cst_26 : f32 to vector<16x1xf32>
    %35 = arith.mulf %33, %34 : vector<16x1xf32>
    %36 = arith.mulf %31, %31 : vector<16x256xf32>
    %cst_27 = arith.constant dense<0.000000e+00> : vector<16xf32>
    %37 = vector.multi_reduction <add>, %36, %cst_27 [1] : vector<16x256xf32> to vector<16xf32>
    %38 = vector.shape_cast %37 : vector<16xf32> to vector<16x1xf32>
    %cst_28 = arith.constant 3.906250e-03 : f32
    %39 = vector.broadcast %cst_28 : f32 to vector<16x1xf32>
    %40 = arith.mulf %38, %39 : vector<16x1xf32>
    %41 = arith.mulf %35, %35 : vector<16x1xf32>
    %42 = arith.subf %40, %41 : vector<16x1xf32>
    %cst_29 = arith.constant 0.000000e+00 : f32
    %43 = vector.broadcast %cst_29 : f32 to vector<16x1xf32>
    %44 = arith.maximumf %42, %43 : vector<16x1xf32>
    %45 = vector.broadcast %35 : vector<16x1xf32> to vector<16x256xf32>
    %46 = arith.subf %31, %45 : vector<16x256xf32>
    %cst_30 = arith.constant 9.99999974E-6 : f32
    %47 = vector.broadcast %cst_30 : f32 to vector<16x1xf32>
    %48 = arith.addf %44, %47 : vector<16x1xf32>
    %49 = math.rsqrt %48 : vector<16x1xf32>
    %50 = vector.broadcast %49 : vector<16x1xf32> to vector<16x256xf32>
    %51 = arith.mulf %46, %50 : vector<16x256xf32>
    %52 = vector.broadcast %23 : vector<1x256xf32> to vector<16x256xf32>
    %53 = arith.mulf %51, %52 : vector<16x256xf32>
    %54 = vector.broadcast %24 : vector<1x256xf32> to vector<16x256xf32>
    %55 = arith.addf %53, %54 : vector<16x256xf32>
    %cst_31 = arith.constant 0.000000e+00 : f32
    %56 = vector.broadcast %cst_31 : f32 to vector<16x256xf32>
    %57 = arith.cmpf oge, %55, %56 : vector<16x256xf32>
    %cst_32 = arith.constant 0.00999999977 : f32
    %58 = vector.broadcast %cst_32 : f32 to vector<16x256xf32>
    %59 = arith.mulf %58, %55 : vector<16x256xf32>
    %60 = arith.select %57, %55, %59 : vector<16x256xi1>, vector<16x256xf32>
    %61 = arith.truncf %60 : vector<16x256xf32> to vector<16x256xbf16>
    %cst_33 = arith.constant dense<0.000000e+00> : vector<16x128xf32>
    %62 = tpu.matmul %61, %21, %cst_33 {dimension_numbers = #tpu.dot_dimension_numbers<[1], [0], [0], [1], [0, 0, 1, 1], [], []>} : vector<16x256xbf16>, vector<256x128xbf16>, vector<16x128xf32> -> vector<16x128xf32>
    %63 = vector.broadcast %25 : vector<1x128xf32> to vector<16x128xf32>
    %64 = arith.addf %62, %63 : vector<16x128xf32>
    %cst_34 = arith.constant dense<0.000000e+00> : vector<16xf32>
    %65 = vector.multi_reduction <add>, %64, %cst_34 [1] : vector<16x128xf32> to vector<16xf32>
    %66 = vector.shape_cast %65 : vector<16xf32> to vector<16x1xf32>
    %cst_35 = arith.constant 7.812500e-03 : f32
    %67 = vector.broadcast %cst_35 : f32 to vector<16x1xf32>
    %68 = arith.mulf %66, %67 : vector<16x1xf32>
    %69 = arith.mulf %64, %64 : vector<16x128xf32>
    %cst_36 = arith.constant dense<0.000000e+00> : vector<16xf32>
    %70 = vector.multi_reduction <add>, %69, %cst_36 [1] : vector<16x128xf32> to vector<16xf32>
    %71 = vector.shape_cast %70 : vector<16xf32> to vector<16x1xf32>
    %cst_37 = arith.constant 7.812500e-03 : f32
    %72 = vector.broadcast %cst_37 : f32 to vector<16x1xf32>
    %73 = arith.mulf %71, %72 : vector<16x1xf32>
    %74 = arith.mulf %68, %68 : vector<16x1xf32>
    %75 = arith.subf %73, %74 : vector<16x1xf32>
    %cst_38 = arith.constant 0.000000e+00 : f32
    %76 = vector.broadcast %cst_38 : f32 to vector<16x1xf32>
    %77 = arith.maximumf %75, %76 : vector<16x1xf32>
    %78 = vector.broadcast %68 : vector<16x1xf32> to vector<16x128xf32>
    %79 = arith.subf %64, %78 : vector<16x128xf32>
    %cst_39 = arith.constant 9.99999974E-6 : f32
    %80 = vector.broadcast %cst_39 : f32 to vector<16x1xf32>
    %81 = arith.addf %77, %80 : vector<16x1xf32>
    %82 = math.rsqrt %81 : vector<16x1xf32>
    %83 = vector.broadcast %82 : vector<16x1xf32> to vector<16x128xf32>
    %84 = arith.mulf %79, %83 : vector<16x128xf32>
    %85 = vector.broadcast %26 : vector<1x128xf32> to vector<16x128xf32>
    %86 = arith.mulf %84, %85 : vector<16x128xf32>
    %87 = vector.broadcast %27 : vector<1x128xf32> to vector<16x128xf32>
    %88 = arith.addf %86, %87 : vector<16x128xf32>
    %89 = arith.addf %19, %88 : vector<16x128xf32>
    %c128_40 = arith.constant 128 : index
    %c0_41 = arith.constant 0 : index
    %90 = vector.load %arg3[%c128_40, %c0_41] : memref<256x256xbf16, #tpu.memory_space<vmem>>, vector<128x256xbf16>
    %c640 = arith.constant 640 : index
    %c0_42 = arith.constant 0 : index
    %91 = vector.load %arg2[%c640, %c0_42] : memref<896x128xbf16, #tpu.memory_space<vmem>>, vector<256x128xbf16>
    %c3_43 = arith.constant 3 : index
    %c0_44 = arith.constant 0 : index
    %92 = vector.load %arg5[%c3_43, %c0_44] : memref<8x256xf32, #tpu.memory_space<vmem>>, vector<1x256xf32>
    %c4_45 = arith.constant 4 : index
    %c0_46 = arith.constant 0 : index
    %93 = vector.load %arg5[%c4_45, %c0_46] : memref<8x256xf32, #tpu.memory_space<vmem>>, vector<1x256xf32>
    %c5_47 = arith.constant 5 : index
    %c0_48 = arith.constant 0 : index
    %94 = vector.load %arg5[%c5_47, %c0_48] : memref<8x256xf32, #tpu.memory_space<vmem>>, vector<1x256xf32>
    %c6 = arith.constant 6 : index
    %c0_49 = arith.constant 0 : index
    %95 = vector.load %arg4[%c6, %c0_49] : memref<16x128xf32, #tpu.memory_space<vmem>>, vector<1x128xf32>
    %c7 = arith.constant 7 : index
    %c0_50 = arith.constant 0 : index
    %96 = vector.load %arg4[%c7, %c0_50] : memref<16x128xf32, #tpu.memory_space<vmem>>, vector<1x128xf32>
    %c8 = arith.constant 8 : index
    %c0_51 = arith.constant 0 : index
    %97 = vector.load %arg4[%c8, %c0_51] : memref<16x128xf32, #tpu.memory_space<vmem>>, vector<1x128xf32>
    %98 = arith.truncf %89 : vector<16x128xf32> to vector<16x128xbf16>
    %cst_52 = arith.constant dense<0.000000e+00> : vector<16x256xf32>
    %99 = tpu.matmul %98, %90, %cst_52 {dimension_numbers = #tpu.dot_dimension_numbers<[1], [0], [0], [1], [0, 0, 1, 1], [], []>} : vector<16x128xbf16>, vector<128x256xbf16>, vector<16x256xf32> -> vector<16x256xf32>
    %100 = vector.broadcast %92 : vector<1x256xf32> to vector<16x256xf32>
    %101 = arith.addf %99, %100 : vector<16x256xf32>
    %cst_53 = arith.constant dense<0.000000e+00> : vector<16xf32>
    %102 = vector.multi_reduction <add>, %101, %cst_53 [1] : vector<16x256xf32> to vector<16xf32>
    %103 = vector.shape_cast %102 : vector<16xf32> to vector<16x1xf32>
    %cst_54 = arith.constant 3.906250e-03 : f32
    %104 = vector.broadcast %cst_54 : f32 to vector<16x1xf32>
    %105 = arith.mulf %103, %104 : vector<16x1xf32>
    %106 = arith.mulf %101, %101 : vector<16x256xf32>
    %cst_55 = arith.constant dense<0.000000e+00> : vector<16xf32>
    %107 = vector.multi_reduction <add>, %106, %cst_55 [1] : vector<16x256xf32> to vector<16xf32>
    %108 = vector.shape_cast %107 : vector<16xf32> to vector<16x1xf32>
    %cst_56 = arith.constant 3.906250e-03 : f32
    %109 = vector.broadcast %cst_56 : f32 to vector<16x1xf32>
    %110 = arith.mulf %108, %109 : vector<16x1xf32>
    %111 = arith.mulf %105, %105 : vector<16x1xf32>
    %112 = arith.subf %110, %111 : vector<16x1xf32>
    %cst_57 = arith.constant 0.000000e+00 : f32
    %113 = vector.broadcast %cst_57 : f32 to vector<16x1xf32>
    %114 = arith.maximumf %112, %113 : vector<16x1xf32>
    %115 = vector.broadcast %105 : vector<16x1xf32> to vector<16x256xf32>
    %116 = arith.subf %101, %115 : vector<16x256xf32>
    %cst_58 = arith.constant 9.99999974E-6 : f32
    %117 = vector.broadcast %cst_58 : f32 to vector<16x1xf32>
    %118 = arith.addf %114, %117 : vector<16x1xf32>
    %119 = math.rsqrt %118 : vector<16x1xf32>
    %120 = vector.broadcast %119 : vector<16x1xf32> to vector<16x256xf32>
    %121 = arith.mulf %116, %120 : vector<16x256xf32>
    %122 = vector.broadcast %93 : vector<1x256xf32> to vector<16x256xf32>
    %123 = arith.mulf %121, %122 : vector<16x256xf32>
    %124 = vector.broadcast %94 : vector<1x256xf32> to vector<16x256xf32>
    %125 = arith.addf %123, %124 : vector<16x256xf32>
    %cst_59 = arith.constant 0.000000e+00 : f32
    %126 = vector.broadcast %cst_59 : f32 to vector<16x256xf32>
    %127 = arith.cmpf oge, %125, %126 : vector<16x256xf32>
    %cst_60 = arith.constant 0.00999999977 : f32
    %128 = vector.broadcast %cst_60 : f32 to vector<16x256xf32>
    %129 = arith.mulf %128, %125 : vector<16x256xf32>
    %130 = arith.select %127, %125, %129 : vector<16x256xi1>, vector<16x256xf32>
    %131 = arith.truncf %130 : vector<16x256xf32> to vector<16x256xbf16>
    %cst_61 = arith.constant dense<0.000000e+00> : vector<16x128xf32>
    %132 = tpu.matmul %131, %91, %cst_61 {dimension_numbers = #tpu.dot_dimension_numbers<[1], [0], [0], [1], [0, 0, 1, 1], [], []>} : vector<16x256xbf16>, vector<256x128xbf16>, vector<16x128xf32> -> vector<16x128xf32>
    %133 = vector.broadcast %95 : vector<1x128xf32> to vector<16x128xf32>
    %134 = arith.addf %132, %133 : vector<16x128xf32>
    %cst_62 = arith.constant dense<0.000000e+00> : vector<16xf32>
    %135 = vector.multi_reduction <add>, %134, %cst_62 [1] : vector<16x128xf32> to vector<16xf32>
    %136 = vector.shape_cast %135 : vector<16xf32> to vector<16x1xf32>
    %cst_63 = arith.constant 7.812500e-03 : f32
    %137 = vector.broadcast %cst_63 : f32 to vector<16x1xf32>
    %138 = arith.mulf %136, %137 : vector<16x1xf32>
    %139 = arith.mulf %134, %134 : vector<16x128xf32>
    %cst_64 = arith.constant dense<0.000000e+00> : vector<16xf32>
    %140 = vector.multi_reduction <add>, %139, %cst_64 [1] : vector<16x128xf32> to vector<16xf32>
    %141 = vector.shape_cast %140 : vector<16xf32> to vector<16x1xf32>
    %cst_65 = arith.constant 7.812500e-03 : f32
    %142 = vector.broadcast %cst_65 : f32 to vector<16x1xf32>
    %143 = arith.mulf %141, %142 : vector<16x1xf32>
    %144 = arith.mulf %138, %138 : vector<16x1xf32>
    %145 = arith.subf %143, %144 : vector<16x1xf32>
    %cst_66 = arith.constant 0.000000e+00 : f32
    %146 = vector.broadcast %cst_66 : f32 to vector<16x1xf32>
    %147 = arith.maximumf %145, %146 : vector<16x1xf32>
    %148 = vector.broadcast %138 : vector<16x1xf32> to vector<16x128xf32>
    %149 = arith.subf %134, %148 : vector<16x128xf32>
    %cst_67 = arith.constant 9.99999974E-6 : f32
    %150 = vector.broadcast %cst_67 : f32 to vector<16x1xf32>
    %151 = arith.addf %147, %150 : vector<16x1xf32>
    %152 = math.rsqrt %151 : vector<16x1xf32>
    %153 = vector.broadcast %152 : vector<16x1xf32> to vector<16x128xf32>
    %154 = arith.mulf %149, %153 : vector<16x128xf32>
    %155 = vector.broadcast %96 : vector<1x128xf32> to vector<16x128xf32>
    %156 = arith.mulf %154, %155 : vector<16x128xf32>
    %157 = vector.broadcast %97 : vector<1x128xf32> to vector<16x128xf32>
    %158 = arith.addf %156, %157 : vector<16x128xf32>
    %159 = arith.addf %89, %158 : vector<16x128xf32>
    %160 = arith.truncf %159 : vector<16x128xf32> to vector<16x128xbf16>
    %cst_68 = arith.constant dense<0.000000e+00> : vector<16x128xf32>
    %161 = tpu.matmul %160, %2, %cst_68 {dimension_numbers = #tpu.dot_dimension_numbers<[1], [0], [0], [1], [0, 0, 1, 1], [], []>} : vector<16x128xbf16>, vector<128x128xbf16>, vector<16x128xf32> -> vector<16x128xf32>
    %162 = vector.broadcast %5 : vector<1x128xf32> to vector<16x128xf32>
    %163 = arith.addf %161, %162 : vector<16x128xf32>
    %c0_69 = arith.constant 0 : index
    %c0_70 = arith.constant 0 : index
    %164 = vector.load %arg6[%c0_69, %c0_70] : memref<16x128xf32, #tpu.memory_space<vmem>>, vector<16x128xf32>
    tpu.vector_store %arg6[%c0_69, %c0_70], %163 {strides = array<i32>} : memref<16x128xf32, #tpu.memory_space<vmem>>, vector<16x128xf32>,
    return
  }
  func.func @transform_0(%arg0: i32) -> (i32, i32) {
    %c0_i32 = arith.constant 0 : i32
    %c0_i32_0 = arith.constant 0 : i32
    return %arg0, %c0_i32 : i32, i32
  }
  func.func @transform_1(%arg0: i32) -> (i32, i32) {
    %c0_i32 = arith.constant 0 : i32
    %c0_i32_0 = arith.constant 0 : i32
    %c0_i32_1 = arith.constant 0 : i32
    return %c0_i32, %c0_i32_0 : i32, i32
  }
  func.func @transform_2(%arg0: i32) -> (i32, i32) {
    %c0_i32 = arith.constant 0 : i32
    %c0_i32_0 = arith.constant 0 : i32
    %c0_i32_1 = arith.constant 0 : i32
    return %c0_i32, %c0_i32_0 : i32, i32
  }
  func.func @transform_3(%arg0: i32) -> (i32, i32) {
    %c0_i32 = arith.constant 0 : i32
    %c0_i32_0 = arith.constant 0 : i32
    %c0_i32_1 = arith.constant 0 : i32
    return %c0_i32, %c0_i32_0 : i32, i32
  }
  func.func @transform_4(%arg0: i32) -> (i32, i32) {
    %c0_i32 = arith.constant 0 : i32
    %c0_i32_0 = arith.constant 0 : i32
    %c0_i32_1 = arith.constant 0 : i32
    return %c0_i32, %c0_i32_0 : i32, i32
  }
  func.func @transform_5(%arg0: i32) -> (i32, i32) {
    %c0_i32 = arith.constant 0 : i32
    %c0_i32_0 = arith.constant 0 : i32
    return %arg0, %c0_i32 : i32, i32
  }
}

</mosaic_0001>

<llo_original>
// kernel: residual_actor_forward.1
$region0: #{residual_actor_forward.1}
  #allocation0 [shape = 'u32[]', space=smem, size = 0x4, offset = 0x4, fixed_abs, tag = 'smem constant byte address 0x4 - core index']
  #allocation1 [shape = 'u32[144,128]{1,0:T(1,128)}', space=vmem, size = 0x12000, scoped, tag = 'internal scratch']
  %s0 = inlined_call_operand.vmem [shape: f32[16,128], index: 0, kind: input, shape index: {}]
  %s1 = inlined_call_operand.hbm [shape: bf16[896,128], index: 1, kind: input, shape index: {}]
  %s2 = inlined_call_operand.hbm [shape: bf16[256,256], index: 2, kind: input, shape index: {}]
  %s3 = inlined_call_operand.vmem [shape: f32[16,128], index: 3, kind: input, shape index: {}]
  %s4 = inlined_call_operand.vmem [shape: f32[8,256], index: 4, kind: input, shape index: {}]
  %s5 = inlined_call_operand.vmem [shape: f32[16,128], index: 5, kind: output, shape index: {}]
  %s6 = sld [smem:[#allocation0]]
  $region38: #{residual_actor_forward.1} parent=0
    _
  %s8 = ssub.s32 1, %s6
  %s9 = scalar_select 0, %s8, %s6
  $region1: #{residual_actor_forward.1} parent=0
    #allocation2 [shape = 'u8[229376]{0}', space=vmem, size = 0x38000, scoped, tag = 'input window, operand 1, single buffered']
    #allocation3 [shape = 's32[1]{0}', space=sflag, size = 0x4, scoped, tag = 'scoped memory for residual_actor_forward.1']
    #allocation4 [shape = 'u8[131072]{0}', space=vmem, size = 0x20000, scoped, tag = 'input window, operand 2, single buffered']
    #allocation5 [shape = 's32[1]{0}', space=sflag, size = 0x4, scoped, tag = 'scoped memory for residual_actor_forward.1']
    %10 = vsyncpa [#allocation3], 0
    %11 = vsyncpa [#allocation5], 0
    // Predicated region
    $region2: #{residual_actor_forward.1} parent=1 // pred_check
      _
    $region3: #{residual_actor_forward.1} parent=1 // pred_check_branch
      %13 = sbr.rel (0) target = $region5
    $region4: #{residual_actor_forward.1} parent=1 // pred_region
      _
    $region5: #{residual_actor_forward.1} parent=1 // pred_fallthru
      _
    // Predicated region
    $region6: #{residual_actor_forward.1} parent=1 // pred_check
      _
    $region7: #{residual_actor_forward.1} parent=1 // pred_check_branch
      %15 = sbr.rel (0) target = $region9
    $region8: #{residual_actor_forward.1} parent=1 // pred_region
      %s17 = ssub.s32 7168, 7168
      %18 = vsyncadd [#allocation3], %s17
      %s19 = sshll.u32 [#allocation2], 4
      %s20 = int_to_ptr.vmem [resolvable:$true] %s19
      %25 = dma.hbm_to_vmem [thread:$0]  %s1, 7168, %s20, [#allocation3], 64, 64, 4
    $region9: #{residual_actor_forward.1} parent=1 // pred_fallthru
      _
    // Predicated region
    $region10: #{residual_actor_forward.1} parent=1 // pred_check
      _
    $region11: #{residual_actor_forward.1} parent=1 // pred_check_branch
      %27 = sbr.rel (0) target = $region13
    $region12: #{residual_actor_forward.1} parent=1 // pred_region
      %s29 = ssub.s32 4096, 4096
      %30 = vsyncadd [#allocation5], %s29
      %s31 = sshll.u32 [#allocation4], 4
      %s32 = int_to_ptr.vmem [resolvable:$true] %s31
      %37 = dma.hbm_to_vmem [thread:$0]  %s2, 4096, %s32, [#allocation5], 128, 128, 8
    $region13: #{residual_actor_forward.1} parent=1 // pred_fallthru
      _
    // Predicated region
    $region14: #{residual_actor_forward.1} parent=1 // pred_check
      _
    $region15: #{residual_actor_forward.1} parent=1 // pred_check_branch
      %39 = sbr.rel (0) target = $region17
    $region16: #{residual_actor_forward.1} parent=1 // pred_region
      _
    $region17: #{residual_actor_forward.1} parent=1 // pred_fallthru
      _
    // Predicated region
    $region18: #{residual_actor_forward.1} parent=1 // pred_check
      _
    $region19: #{residual_actor_forward.1} parent=1 // pred_check_branch
      %41 = sbr.rel (0) target = $region21
    $region20: #{residual_actor_forward.1} parent=1 // pred_region
      _
    $region21: #{residual_actor_forward.1} parent=1 // pred_fallthru
      _
    // Predicated region
    $region22: #{residual_actor_forward.1} parent=1 // pred_check
      _
    $region23: #{residual_actor_forward.1} parent=1 // pred_check_branch
      %43 = sbr.rel (0) target = $region25
    $region24: #{residual_actor_forward.1} parent=1 // pred_region
      %44 = dma.done [#allocation3], 7168
    $region25: #{residual_actor_forward.1} parent=1 // pred_fallthru
      _
    // Predicated region
    $region26: #{residual_actor_forward.1} parent=1 // pred_check
      _
    $region27: #{residual_actor_forward.1} parent=1 // pred_check_branch
      %46 = sbr.rel (0) target = $region29
    $region28: #{residual_actor_forward.1} parent=1 // pred_region
      %47 = dma.done [#allocation5], 4096
    $region29: #{residual_actor_forward.1} parent=1 // pred_fallthru
      _
    %v49 = vld [vmem:[#allocation2] sm:$0xf]
    %v50 = vld [vmem:[#allocation2 + $0x4] sm:$0xf]
    %v51 = vld [vmem:[#allocation2 + $0x8] sm:$0xf]
    %v52 = vld [vmem:[#allocation2 + $0xc] sm:$0xf]
    %v53 = vld [vmem:[#allocation2 + $0x10] sm:$0xf]
    %v54 = vld [vmem:[#allocation2 + $0x14] sm:$0xf]
    %v55 = vld [vmem:[#allocation2 + $0x18] sm:$0xf]
    %v56 = vld [vmem:[#allocation2 + $0x1c] sm:$0xf]
    %v57 = vld [vmem:[#allocation2 + $0x20] sm:$0xf]
    %v58 = vld [vmem:[#allocation2 + $0x24] sm:$0xf]
    %v59 = vld [vmem:[#allocation2 + $0x28] sm:$0xf]
    %v60 = vld [vmem:[#allocation2 + $0x2c] sm:$0xf]
    %v61 = vld [vmem:[#allocation2 + $0x30] sm:$0xf]
    %v62 = vld [vmem:[#allocation2 + $0x34] sm:$0xf]
    %v63 = vld [vmem:[#allocation2 + $0x38] sm:$0xf]
    %v64 = vld [vmem:[#allocation2 + $0x3c] sm:$0xf]
    %v65 = vld [vmem:[#allocation2 + $0x40] sm:$0xf]
    %v66 = vld [vmem:[#allocation2 + $0x44] sm:$0xf]
    %v67 = vld [vmem:[#allocation2 + $0x48] sm:$0xf]
    %v68 = vld [vmem:[#allocation2 + $0x4c] sm:$0xf]
    %v69 = vld [vmem:[#allocation2 + $0x50] sm:$0xf]
    %v70 = vld [vmem:[#allocation2 + $0x54] sm:$0xf]
    %v71 = vld [vmem:[#allocation2 + $0x58] sm:$0xf]
    %v72 = vld [vmem:[#allocation2 + $0x5c] sm:$0xf]
    %v73 = vld [vmem:[#allocation2 + $0x60] sm:$0xf]
    %v74 = vld [vmem:[#allocation2 + $0x64] sm:$0xf]
    %v75 = vld [vmem:[#allocation2 + $0x68] sm:$0xf]
    %v76 = vld [vmem:[#allocation2 + $0x6c] sm:$0xf]
    %v77 = vld [vmem:[#allocation2 + $0x70] sm:$0xf]
    %v78 = vld [vmem:[#allocation2 + $0x74] sm:$0xf]
    %v79 = vld [vmem:[#allocation2 + $0x78] sm:$0xf]
    %v80 = vld [vmem:[#allocation2 + $0x7c] sm:$0xf]
    %v81 = vld [vmem:[#allocation2 + $0x80] sm:$0xf]
    %v82 = vld [vmem:[#allocation2 + $0x84] sm:$0xf]
    %v83 = vld [vmem:[#allocation2 + $0x88] sm:$0xf]
    %v84 = vld [vmem:[#allocation2 + $0x8c] sm:$0xf]
    %v85 = vld [vmem:[#allocation2 + $0x90] sm:$0xf]
    %v86 = vld [vmem:[#allocation2 + $0x94] sm:$0xf]
    %v87 = vld [vmem:[#allocation2 + $0x98] sm:$0xf]
    %v88 = vld [vmem:[#allocation2 + $0x9c] sm:$0xf]
    %v89 = vld [vmem:[#allocation2 + $0xa0] sm:$0xf]
    %v90 = vld [vmem:[#allocation2 + $0xa4] sm:$0xf]
    %v91 = vld [vmem:[#allocation2 + $0xa8] sm:$0xf]
    %v92 = vld [vmem:[#allocation2 + $0xac] sm:$0xf]
    %v93 = vld [vmem:[#allocation2 + $0xb0] sm:$0xf]
    %v94 = vld [vmem:[#allocation2 + $0xb4] sm:$0xf]
    %v95 = vld [vmem:[#allocation2 + $0xb8] sm:$0xf]
    %v96 = vld [vmem:[#allocation2 + $0xbc] sm:$0xf]
    %v97 = vld [vmem:[%s3] sm:$0x1]
    %v98 = vld [vmem:[%s3 + $0x1] sm:$0x1]
    %v99 = vld [vmem:[%s3 + $0x2] sm:$0x1]
    %v100 = vld [vmem:[%s0] sm:$0xff]
    %v101 = vld [vmem:[%s0 + $0x8] sm:$0xff]
    %v102 = vpack.c.bf16 %v101, %v100
    %v103 = vlaneseq
    %v104 = vshrl.u32 %v103, 7
    %v105 = vsub.s32 0, %v104
    %v106 = vrot.slane %v97, %v105
    %v123 = vunpack.c.l.b16 %v49
    %v124 = vunpack.c.l.b16 %v50
    %v125 = vunpack.c.l.b16 %v51
    %v126 = vunpack.c.l.b16 %v52
    %v127 = vunpack.c.l.b16 %v53
    %v128 = vunpack.c.l.b16 %v54
    %v129 = vunpack.c.l.b16 %v55
    %v130 = vunpack.c.l.b16 %v56
    %v131 = vunpack.c.l.b16 %v57
    %v132 = vunpack.c.l.b16 %v58
    %v133 = vunpack.c.l.b16 %v59
    %v134 = vunpack.c.l.b16 %v60
    %v135 = vunpack.c.l.b16 %v61
    %v136 = vunpack.c.l.b16 %v62
    %v137 = vunpack.c.l.b16 %v63
    %v138 = vunpack.c.l.b16 %v64
    %v139 = vpack.c.b16 %v124, %v123
    %v140 = vpack.c.b16 %v126, %v125
    %v141 = vpack.c.b16 %v128, %v127
    %v142 = vpack.c.b16 %v130, %v129
    %v143 = vpack.c.b16 %v132, %v131
    %v144 = vpack.c.b16 %v134, %v133
    %v145 = vpack.c.b16 %v136, %v135
    %v146 = vpack.c.b16 %v138, %v137
    %155 = vmatprep.subr.bf16.mxu0 0
    %156 = vmatpush1.bf16.msra.mxu0 %v139
    %157 = vmatprep.subr.bf16.mxu0 0
    %158 = vmatpush1.bf16.msra.mxu0 %v140
    %159 = vmatprep.subr.bf16.mxu0 0
    %160 = vmatpush1.bf16.msra.mxu0 %v141
    %161 = vmatprep.subr.bf16.mxu0 0
    %162 = vmatpush1.bf16.msra.mxu0 %v142
    %163 = vmatprep.subr.bf16.mxu0 0
    %164 = vmatpush1.bf16.msra.mxu0 %v143
    %165 = vmatprep.subr.bf16.mxu0 0
    %166 = vmatpush1.bf16.msra.mxu0 %v144
    %167 = vmatprep.subr.bf16.mxu0 0
    %168 = vmatpush1.bf16.msra.mxu0 %v145
    %169 = vmatprep.subr.bf16.mxu0 0
    %170 = vmatpush1.bf16.msra.mxu0 %v146
    %171 = vmatprep.subr.bf16.mxu0 0
    %172 = vmatpush1.bf16.msra.mxu0 0
    %173 = vmatprep.subr.bf16.mxu0 0
    %174 = vmatpush1.bf16.msra.mxu0 0
    %175 = vmatprep.subr.bf16.mxu0 0
    %176 = vmatpush1.bf16.msra.mxu0 0
    %177 = vmatprep.subr.bf16.mxu0 0
    %178 = vmatpush1.bf16.msra.mxu0 0
    %179 = vmatprep.subr.bf16.mxu0 0
    %180 = vmatpush1.bf16.msra.mxu0 0
    %181 = vmatprep.subr.bf16.mxu0 0
    %182 = vmatpush1.bf16.msra.mxu0 0
    %183 = vmatprep.subr.bf16.mxu0 0
    %184 = vmatpush1.bf16.msra.mxu0 0
    %185 = vmatprep.subr.bf16.mxu0 0
    %186 = vmatpush1.bf16.msra.mxu0 0
    %187 = vmatprep.mubr.bf16.mxu0 0
    %188 = vmatmul.mubr.bf16.gmra.mrb[0].mxu0 %v102
    %v189 = vpop.f32.mrb[0].mxu0
    %v190 = vadd.f32 %v106, %v189
    %v191 = vpop.f32.mrb[0].mxu0
    %v192 = vpop.f32.mrb[0].mxu0
    %v193 = vadd.f32 %v106, %v192
    %v194 = vpop.f32.mrb[0].mxu0
    %195 = vdwg.mxu0
    %vm196 = vcmp.ge.f32.partialorder %v190, 0.0
    %vm197 = vcmp.ge.f32.partialorder %v193, 0.0
    %v198 = vmul.f32 %v190, 0.01
    %v199 = vmul.f32 %v193, 0.01
    %v200 = vsel %vm196, %v190, %v198
    %v201 = vsel %vm197, %v193, %v199
    %v202 = vpack.c.bf16 %v201, %v200
    %v203 = vlaneseq
    %v204 = vshrl.u32 %v203, 7
    %v205 = vsub.s32 0, %v204
    %v206 = vrot.slane %v98, %v205
    %v223 = vunpack.c.l.b16 %v65
    %v224 = vunpack.c.l.b16 %v66
    %v225 = vunpack.c.l.b16 %v67
    %v226 = vunpack.c.l.b16 %v68
    %v227 = vunpack.c.l.b16 %v69
    %v228 = vunpack.c.l.b16 %v70
    %v229 = vunpack.c.l.b16 %v71
    %v230 = vunpack.c.l.b16 %v72
    %v231 = vunpack.c.l.b16 %v73
    %v232 = vunpack.c.l.b16 %v74
    %v233 = vunpack.c.l.b16 %v75
    %v234 = vunpack.c.l.b16 %v76
    %v235 = vunpack.c.l.b16 %v77
    %v236 = vunpack.c.l.b16 %v78
    %v237 = vunpack.c.l.b16 %v79
    %v238 = vunpack.c.l.b16 %v80
    %v239 = vpack.c.b16 %v224, %v223
    %v240 = vpack.c.b16 %v226, %v225
    %v241 = vpack.c.b16 %v228, %v227
    %v242 = vpack.c.b16 %v230, %v229
    %v243 = vpack.c.b16 %v232, %v231
    %v244 = vpack.c.b16 %v234, %v233
    %v245 = vpack.c.b16 %v236, %v235
    %v246 = vpack.c.b16 %v238, %v237
    %255 = vmatprep.subr.bf16.mxu0 0
    %256 = vmatpush1.bf16.msra.mxu0 %v239
    %257 = vmatprep.subr.bf16.mxu0 0
    %258 = vmatpush1.bf16.msra.mxu0 %v240
    %259 = vmatprep.subr.bf16.mxu0 0
    %260 = vmatpush1.bf16.msra.mxu0 %v241
    %261 = vmatprep.subr.bf16.mxu0 0
    %262 = vmatpush1.bf16.msra.mxu0 %v242
    %263 = vmatprep.subr.bf16.mxu0 0
    %264 = vmatpush1.bf16.msra.mxu0 %v243
    %265 = vmatprep.subr.bf16.mxu0 0
    %266 = vmatpush1.bf16.msra.mxu0 %v244
    %267 = vmatprep.subr.bf16.mxu0 0
    %268 = vmatpush1.bf16.msra.mxu0 %v245
    %269 = vmatprep.subr.bf16.mxu0 0
    %270 = vmatpush1.bf16.msra.mxu0 %v246
    %271 = vmatprep.subr.bf16.mxu0 0
    %272 = vmatpush1.bf16.msra.mxu0 0
    %273 = vmatprep.subr.bf16.mxu0 0
    %274 = vmatpush1.bf16.msra.mxu0 0
    %275 = vmatprep.subr.bf16.mxu0 0
    %276 = vmatpush1.bf16.msra.mxu0 0
    %277 = vmatprep.subr.bf16.mxu0 0
    %278 = vmatpush1.bf16.msra.mxu0 0
    %279 = vmatprep.subr.bf16.mxu0 0
    %280 = vmatpush1.bf16.msra.mxu0 0
    %281 = vmatprep.subr.bf16.mxu0 0
    %282 = vmatpush1.bf16.msra.mxu0 0
    %283 = vmatprep.subr.bf16.mxu0 0
    %284 = vmatpush1.bf16.msra.mxu0 0
    %285 = vmatprep.subr.bf16.mxu0 0
    %286 = vmatpush1.bf16.msra.mxu0 0
    %287 = vmatprep.mubr.bf16.mxu0 0
    %288 = vmatmul.mubr.bf16.gmra.mrb[0].mxu0 %v202
    %v289 = vpop.f32.mrb[0].mxu0
    %v290 = vadd.f32 %v206, %v289
    %v291 = vpop.f32.mrb[0].mxu0
    %v292 = vpop.f32.mrb[0].mxu0
    %v293 = vadd.f32 %v206, %v292
    %v294 = vpop.f32.mrb[0].mxu0
    %295 = vdwg.mxu0
    %v296 = vld [vmem:[#allocation4] sm:$0xff]
    %v297 = vld [vmem:[#allocation4 + $0x8] sm:$0xff]
    %v298 = vld [vmem:[#allocation4 + $0x10] sm:$0xff]
    %v299 = vld [vmem:[#allocation4 + $0x18] sm:$0xff]
    %v300 = vld [vmem:[#allocation4 + $0x20] sm:$0xff]
    %v301 = vld [vmem:[#allocation4 + $0x28] sm:$0xff]
    %v302 = vld [vmem:[#allocation4 + $0x30] sm:$0xff]
    %v303 = vld [vmem:[#allocation4 + $0x38] sm:$0xff]
    %v304 = vld [vmem:[#allocation4 + $0x40] sm:$0xff]
    %v305 = vld [vmem:[#allocation4 + $0x48] sm:$0xff]
    %v306 = vld [vmem:[#allocation4 + $0x50] sm:$0xff]
    %v307 = vld [vmem:[#allocation4 + $0x58] sm:$0xff]
    %v308 = vld [vmem:[#allocation4 + $0x60] sm:$0xff]
    %v309 = vld [vmem:[#allocation4 + $0x68] sm:$0xff]
    %v310 = vld [vmem:[#allocation4 + $0x70] sm:$0xff]
    %v311 = vld [vmem:[#allocation4 + $0x78] sm:$0xff]
    %v312 = vld [vmem:[#allocation2 + $0xc0] sm:$0xf]
    %v313 = vld [vmem:[#allocation2 + $0xc4] sm:$0xf]
    %v314 = vld [vmem:[#allocation2 + $0xc8] sm:$0xf]
    %v315 = vld [vmem:[#allocation2 + $0xcc] sm:$0xf]
    %v316 = vld [vmem:[#allocation2 + $0xd0] sm:$0xf]
    %v317 = vld [vmem:[#allocation2 + $0xd4] sm:$0xf]
    %v318 = vld [vmem:[#allocation2 + $0xd8] sm:$0xf]
    %v319 = vld [vmem:[#allocation2 + $0xdc] sm:$0xf]
    %v320 = vld [vmem:[#allocation2 + $0xe0] sm:$0xf]
    %v321 = vld [vmem:[#allocation2 + $0xe4] sm:$0xf]
    %v322 = vld [vmem:[#allocation2 + $0xe8] sm:$0xf]
    %v323 = vld [vmem:[#allocation2 + $0xec] sm:$0xf]
    %v324 = vld [vmem:[#allocation2 + $0xf0] sm:$0xf]
    %v325 = vld [vmem:[#allocation2 + $0xf4] sm:$0xf]
    %v326 = vld [vmem:[#allocation2 + $0xf8] sm:$0xf]
    %v327 = vld [vmem:[#allocation2 + $0xfc] sm:$0xf]
    %v328 = vld [vmem:[#allocation2 + $0x100] sm:$0xf]
    %v329 = vld [vmem:[#allocation2 + $0x104] sm:$0xf]
    %v330 = vld [vmem:[#allocation2 + $0x108] sm:$0xf]
    %v331 = vld [vmem:[#allocation2 + $0x10c] sm:$0xf]
    %v332 = vld [vmem:[#allocation2 + $0x110] sm:$0xf]
    %v333 = vld [vmem:[#allocation2 + $0x114] sm:$0xf]
    %v334 = vld [vmem:[#allocation2 + $0x118] sm:$0xf]
    %v335 = vld [vmem:[#allocation2 + $0x11c] sm:$0xf]
    %v336 = vld [vmem:[#allocation2 + $0x120] sm:$0xf]
    %v337 = vld [vmem:[#allocation2 + $0x124] sm:$0xf]
    %v338 = vld [vmem:[#allocation2 + $0x128] sm:$0xf]
    %v339 = vld [vmem:[#allocation2 + $0x12c] sm:$0xf]
    %v340 = vld [vmem:[#allocation2 + $0x130] sm:$0xf]
    %v341 = vld [vmem:[#allocation2 + $0x134] sm:$0xf]
    %v342 = vld [vmem:[#allocation2 + $0x138] sm:$0xf]
    %v343 = vld [vmem:[#allocation2 + $0x13c] sm:$0xf]
    %v344 = vld [vmem:[%s4] ss:$8 sm:$0x3]
    %s345 = scalar_lea.vmem %s4, 1
    %v346 = vld [vmem:[%s345] ss:$8 sm:$0x3]
    %s347 = scalar_lea.vmem %s4, 2
    %v348 = vld [vmem:[%s347] ss:$8 sm:$0x3]
    %v349 = vld [vmem:[%s3 + $0x3] sm:$0x1]
    %v350 = vld [vmem:[%s3 + $0x4] sm:$0x1]
    %v351 = vld [vmem:[%s3 + $0x5] sm:$0x1]
    %v352 = vpack.c.bf16 %v293, %v290
    %v354 = vlaneseq
    %v355 = vshrl.u32 %v354, 7
    %v356 = vsub.s32 0, %v355
    %v357 = vrot.slane %v344, %v356
    %v358 = vlaneseq
    %v359 = vshrl.u32 %v358, 7
    %v360 = vsub.s32 1, %v359
    %v361 = vrot.slane %v344, %v360
    %v380 = vunpack.c.l.b16 %v296
    %v381 = vunpack.c.h.b16 %v296
    %v382 = vunpack.c.l.b16 %v297
    %v383 = vunpack.c.h.b16 %v297
    %v384 = vunpack.c.l.b16 %v298
    %v385 = vunpack.c.h.b16 %v298
    %v386 = vunpack.c.l.b16 %v299
    %v387 = vunpack.c.h.b16 %v299
    %v388 = vunpack.c.l.b16 %v300
    %v389 = vunpack.c.h.b16 %v300
    %v390 = vunpack.c.l.b16 %v301
    %v391 = vunpack.c.h.b16 %v301
    %v392 = vunpack.c.l.b16 %v302
    %v393 = vunpack.c.h.b16 %v302
    %v394 = vunpack.c.l.b16 %v303
    %v395 = vunpack.c.h.b16 %v303
    %v396 = vunpack.c.l.b16 %v304
    %v397 = vunpack.c.h.b16 %v304
    %v398 = vunpack.c.l.b16 %v305
    %v399 = vunpack.c.h.b16 %v305
    %v400 = vunpack.c.l.b16 %v306
    %v401 = vunpack.c.h.b16 %v306
    %v402 = vunpack.c.l.b16 %v307
    %v403 = vunpack.c.h.b16 %v307
    %v404 = vunpack.c.l.b16 %v308
    %v405 = vunpack.c.h.b16 %v308
    %v406 = vunpack.c.l.b16 %v309
    %v407 = vunpack.c.h.b16 %v309
    %v408 = vunpack.c.l.b16 %v310
    %v409 = vunpack.c.h.b16 %v310
    %v410 = vunpack.c.l.b16 %v311
    %v411 = vunpack.c.h.b16 %v311
    %v412 = vpack.c.b16 %v382, %v380
    %v413 = vpack.c.b16 %v383, %v381
    %v414 = vpack.c.b16 %v386, %v384
    %v415 = vpack.c.b16 %v387, %v385
    %v416 = vpack.c.b16 %v390, %v388
    %v417 = vpack.c.b16 %v391, %v389
    %v418 = vpack.c.b16 %v394, %v392
    %v419 = vpack.c.b16 %v395, %v393
    %v420 = vpack.c.b16 %v398, %v396
    %v421 = vpack.c.b16 %v399, %v397
    %v422 = vpack.c.b16 %v402, %v400
    %v423 = vpack.c.b16 %v403, %v401
    %v424 = vpack.c.b16 %v406, %v404
    %v425 = vpack.c.b16 %v407, %v405
    %v426 = vpack.c.b16 %v410, %v408
    %v427 = vpack.c.b16 %v411, %v409
    %444 = vmatprep.subr.bf16.mxu0 %v413
    %445 = vmatpush1.bf16.msra.mxu0 %v412
    %446 = vmatprep.subr.bf16.mxu0 %v415
    %447 = vmatpush1.bf16.msra.mxu0 %v414
    %448 = vmatprep.subr.bf16.mxu0 %v417
    %449 = vmatpush1.bf16.msra.mxu0 %v416
    %450 = vmatprep.subr.bf16.mxu0 %v419
    %451 = vmatpush1.bf16.msra.mxu0 %v418
    %452 = vmatprep.subr.bf16.mxu0 %v421
    %453 = vmatpush1.bf16.msra.mxu0 %v420
    %454 = vmatprep.subr.bf16.mxu0 %v423
    %455 = vmatpush1.bf16.msra.mxu0 %v422
    %456 = vmatprep.subr.bf16.mxu0 %v425
    %457 = vmatpush1.bf16.msra.mxu0 %v424
    %458 = vmatprep.subr.bf16.mxu0 %v427
    %459 = vmatpush1.bf16.msra.mxu0 %v426
    %460 = vmatprep.subr.bf16.mxu0 0
    %461 = vmatpush1.bf16.msra.mxu0 0
    %462 = vmatprep.subr.bf16.mxu0 0
    %463 = vmatpush1.bf16.msra.mxu0 0
    %464 = vmatprep.subr.bf16.mxu0 0
    %465 = vmatpush1.bf16.msra.mxu0 0
    %466 = vmatprep.subr.bf16.mxu0 0
    %467 = vmatpush1.bf16.msra.mxu0 0
    %468 = vmatprep.subr.bf16.mxu0 0
    %469 = vmatpush1.bf16.msra.mxu0 0
    %470 = vmatprep.subr.bf16.mxu0 0
    %471 = vmatpush1.bf16.msra.mxu0 0
    %472 = vmatprep.subr.bf16.mxu0 0
    %473 = vmatpush1.bf16.msra.mxu0 0
    %474 = vmatprep.subr.bf16.mxu0 0
    %475 = vmatpush1.bf16.msra.mxu0 0
    %476 = vmatprep.mubr.bf16.mxu0 0
    %477 = vmatmul.mubr.bf16.gmra.mrb[0].mxu0 %v352
    %v478 = vpop.f32.mrb[0].mxu0
    %v479 = vadd.f32 %v357, %v478
    %v480 = vpop.f32.mrb[0].mxu0
    %v481 = vadd.f32 %v361, %v480
    %v482 = vpop.f32.mrb[0].mxu0
    %v483 = vadd.f32 %v357, %v482
    %v484 = vpop.f32.mrb[0].mxu0
    %v485 = vadd.f32 %v361, %v484
    %486 = vdwg.mxu0
    %v487 = vadd.f32 %v479, %v481
    %488 = vadd.xlane.f32.xlu0 %v487
    %v489 = vpop.xlane.xlu0 %488
    %v490 = vadd.f32 %v483, %v485
    %491 = vadd.xlane.f32.xlu0 %v490
    %v492 = vpop.xlane.xlu0 %491
    %v493 = vmul.f32 %v489, 0.00390625
    %v494 = vmul.f32 %v492, 0.00390625
    %v495 = vmul.f32 %v479, %v479
    %v496 = vmul.f32 %v481, %v481
    %v497 = vmul.f32 %v483, %v483
    %v498 = vmul.f32 %v485, %v485
    %v499 = vadd.f32 %v495, %v496
    %500 = vadd.xlane.f32.xlu0 %v499
    %v501 = vpop.xlane.xlu0 %500
    %v502 = vadd.f32 %v497, %v498
    %503 = vadd.xlane.f32.xlu0 %v502
    %v504 = vpop.xlane.xlu0 %503
    %v505 = vmul.f32 %v501, 0.00390625
    %v506 = vmul.f32 %v504, 0.00390625
    %v507 = vmul.f32 %v493, %v493
    %v508 = vmul.f32 %v494, %v494
    %v509 = vsub.f32 %v505, %v507
    %v510 = vsub.f32 %v506, %v508
    %v511 = vmax.f32 %v509, 0.0
    %v512 = vmax.f32 %v510, 0.0
    %v513 = vsub.f32 %v479, %v493
    %v514 = vsub.f32 %v481, %v493
    %v515 = vsub.f32 %v483, %v494
    %v516 = vsub.f32 %v485, %v494
    %v517 = vadd.f32 %v511, 1e-05
    %v518 = vadd.f32 %v512, 1e-05
    %v519 = vrsqrt.pop %v517
    %v520 = vrsqrt.pop %v518
    %v521 = vmul.f32 %v513, %v519
    %v522 = vmul.f32 %v514, %v519
    %v523 = vmul.f32 %v515, %v520
    %v524 = vmul.f32 %v516, %v520
    %v526 = vlaneseq
    %v527 = vshrl.u32 %v526, 7
    %v528 = vsub.s32 0, %v527
    %v529 = vrot.slane %v346, %v528
    %v530 = vlaneseq
    %v531 = vshrl.u32 %v530, 7
    %v532 = vsub.s32 1, %v531
    %v533 = vrot.slane %v346, %v532
    %v536 = vmul.f32 %v521, %v529
    %v537 = vmul.f32 %v522, %v533
    %v538 = vmul.f32 %v523, %v529
    %v539 = vmul.f32 %v524, %v533
    %v541 = vlaneseq
    %v542 = vshrl.u32 %v541, 7
    %v543 = vsub.s32 0, %v542
    %v544 = vrot.slane %v348, %v543
    %v545 = vlaneseq
    %v546 = vshrl.u32 %v545, 7
    %v547 = vsub.s32 1, %v546
    %v548 = vrot.slane %v348, %v547
    %v551 = vadd.f32 %v536, %v544
    %v552 = vadd.f32 %v537, %v548
    %v553 = vadd.f32 %v538, %v544
    %v554 = vadd.f32 %v539, %v548
    %vm555 = vcmp.ge.f32.partialorder %v551, 0.0
    %vm556 = vcmp.ge.f32.partialorder %v552, 0.0
    %vm557 = vcmp.ge.f32.partialorder %v553, 0.0
    %vm558 = vcmp.ge.f32.partialorder %v554, 0.0
    %v559 = vmul.f32 %v551, 0.01
    %v560 = vmul.f32 %v552, 0.01
    %v561 = vmul.f32 %v553, 0.01
    %v562 = vmul.f32 %v554, 0.01
    %v563 = vsel %vm555, %v551, %v559
    %v564 = vsel %vm556, %v552, %v560
    %v565 = vsel %vm557, %v553, %v561
    %v566 = vsel %vm558, %v554, %v562
    %v567 = vpack.c.bf16 %v565, %v563
    %v568 = vpack.c.bf16 %v566, %v564
    %v569 = vlaneseq
    %v570 = vshrl.u32 %v569, 7
    %v571 = vsub.s32 0, %v570
    %v572 = vrot.slane %v349, %v571
    %v605 = vunpack.c.l.b16 %v312
    %v606 = vunpack.c.l.b16 %v313
    %v607 = vunpack.c.l.b16 %v314
    %v608 = vunpack.c.l.b16 %v315
    %v609 = vunpack.c.l.b16 %v316
    %v610 = vunpack.c.l.b16 %v317
    %v611 = vunpack.c.l.b16 %v318
    %v612 = vunpack.c.l.b16 %v319
    %v613 = vunpack.c.l.b16 %v320
    %v614 = vunpack.c.l.b16 %v321
    %v615 = vunpack.c.l.b16 %v322
    %v616 = vunpack.c.l.b16 %v323
    %v617 = vunpack.c.l.b16 %v324
    %v618 = vunpack.c.l.b16 %v325
    %v619 = vunpack.c.l.b16 %v326
    %v620 = vunpack.c.l.b16 %v327
    %v621 = vunpack.c.l.b16 %v328
    %v622 = vunpack.c.l.b16 %v329
    %v623 = vunpack.c.l.b16 %v330
    %v624 = vunpack.c.l.b16 %v331
    %v625 = vunpack.c.l.b16 %v332
    %v626 = vunpack.c.l.b16 %v333
    %v627 = vunpack.c.l.b16 %v334
    %v628 = vunpack.c.l.b16 %v335
    %v629 = vunpack.c.l.b16 %v336
    %v630 = vunpack.c.l.b16 %v337
    %v631 = vunpack.c.l.b16 %v338
    %v632 = vunpack.c.l.b16 %v339
    %v633 = vunpack.c.l.b16 %v340
    %v634 = vunpack.c.l.b16 %v341
    %v635 = vunpack.c.l.b16 %v342
    %v636 = vunpack.c.l.b16 %v343
    %v637 = vpack.c.b16 %v606, %v605
    %v638 = vpack.c.b16 %v608, %v607
    %v639 = vpack.c.b16 %v610, %v609
    %v640 = vpack.c.b16 %v612, %v611
    %v641 = vpack.c.b16 %v614, %v613
    %v642 = vpack.c.b16 %v616, %v615
    %v643 = vpack.c.b16 %v618, %v617
    %v644 = vpack.c.b16 %v620, %v619
    %v645 = vpack.c.b16 %v622, %v621
    %v646 = vpack.c.b16 %v624, %v623
    %v647 = vpack.c.b16 %v626, %v625
    %v648 = vpack.c.b16 %v628, %v627
    %v649 = vpack.c.b16 %v630, %v629
    %v650 = vpack.c.b16 %v632, %v631
    %v651 = vpack.c.b16 %v634, %v633
    %v652 = vpack.c.b16 %v636, %v635
    %669 = vmatprep.subr.bf16.mxu0 0
    %670 = vmatpush1.bf16.msra.mxu0 %v637
    %671 = vmatprep.subr.bf16.mxu0 0
    %672 = vmatpush1.bf16.msra.mxu0 %v638
    %673 = vmatprep.subr.bf16.mxu0 0
    %674 = vmatpush1.bf16.msra.mxu0 %v639
    %675 = vmatprep.subr.bf16.mxu0 0
    %676 = vmatpush1.bf16.msra.mxu0 %v640
    %677 = vmatprep.subr.bf16.mxu0 0
    %678 = vmatpush1.bf16.msra.mxu0 %v641
    %679 = vmatprep.subr.bf16.mxu0 0
    %680 = vmatpush1.bf16.msra.mxu0 %v642
    %681 = vmatprep.subr.bf16.mxu0 0
    %682 = vmatpush1.bf16.msra.mxu0 %v643
    %683 = vmatprep.subr.bf16.mxu0 0
    %684 = vmatpush1.bf16.msra.mxu0 %v644
    %685 = vmatprep.subr.bf16.mxu0 0
    %686 = vmatpush1.bf16.msra.mxu0 %v645
    %687 = vmatprep.subr.bf16.mxu0 0
    %688 = vmatpush1.bf16.msra.mxu0 %v646
    %689 = vmatprep.subr.bf16.mxu0 0
    %690 = vmatpush1.bf16.msra.mxu0 %v647
    %691 = vmatprep.subr.bf16.mxu0 0
    %692 = vmatpush1.bf16.msra.mxu0 %v648
    %693 = vmatprep.subr.bf16.mxu0 0
    %694 = vmatpush1.bf16.msra.mxu0 %v649
    %695 = vmatprep.subr.bf16.mxu0 0
    %696 = vmatpush1.bf16.msra.mxu0 %v650
    %697 = vmatprep.subr.bf16.mxu0 0
    %698 = vmatpush1.bf16.msra.mxu0 %v651
    %699 = vmatprep.subr.bf16.mxu0 0
    %700 = vmatpush1.bf16.msra.mxu0 %v652
    %701 = vmatprep.mubr.bf16.mxu0 %v568
    %702 = vmatmul.mubr.bf16.gmra.mrb[0].mxu0 %v567
    %v703 = vpop.f32.mrb[0].mxu0
    %v704 = vadd.f32 %v572, %v703
    %v705 = vpop.f32.mrb[0].mxu0
    %v706 = vpop.f32.mrb[0].mxu0
    %v707 = vadd.f32 %v572, %v706
    %v708 = vpop.f32.mrb[0].mxu0
    %709 = vdwg.mxu0
    %710 = vadd.xlane.f32.xlu0 %v704
    %v711 = vpop.xlane.xlu0 %710
    %712 = vadd.xlane.f32.xlu0 %v707
    %v713 = vpop.xlane.xlu0 %712
    %v714 = vmul.f32 %v711, 0.0078125
    %v715 = vmul.f32 %v713, 0.0078125
    %v716 = vmul.f32 %v704, %v704
    %v717 = vmul.f32 %v707, %v707
    %718 = vadd.xlane.f32.xlu0 %v716
    %v719 = vpop.xlane.xlu0 %718
    %720 = vadd.xlane.f32.xlu0 %v717
    %v721 = vpop.xlane.xlu0 %720
    %v722 = vmul.f32 %v719, 0.0078125
    %v723 = vmul.f32 %v721, 0.0078125
    %v724 = vmul.f32 %v714, %v714
    %v725 = vmul.f32 %v715, %v715
    %v726 = vsub.f32 %v722, %v724
    %v727 = vsub.f32 %v723, %v725
    %v728 = vmax.f32 %v726, 0.0
    %v729 = vmax.f32 %v727, 0.0
    %v730 = vsub.f32 %v704, %v714
    %v731 = vsub.f32 %v707, %v715
    %v732 = vadd.f32 %v728, 1e-05
    %v733 = vadd.f32 %v729, 1e-05
    %v734 = vrsqrt.pop %v732
    %v735 = vrsqrt.pop %v733
    %v736 = vmul.f32 %v730, %v734
    %v737 = vmul.f32 %v731, %v735
    %v738 = vlaneseq
    %v739 = vshrl.u32 %v738, 7
    %v740 = vsub.s32 0, %v739
    %v741 = vrot.slane %v350, %v740
    %v742 = vmul.f32 %v736, %v741
    %v743 = vmul.f32 %v737, %v741
    %v744 = vlaneseq
    %v745 = vshrl.u32 %v744, 7
    %v746 = vsub.s32 0, %v745
    %v747 = vrot.slane %v351, %v746
    %v748 = vadd.f32 %v742, %v747
    %v749 = vadd.f32 %v743, %v747
    %v750 = vadd.f32 %v290, %v748
    %v751 = vadd.f32 %v293, %v749
    %v752 = vld [vmem:[#allocation4 + $0x80] sm:$0xff]
    %v753 = vld [vmem:[#allocation4 + $0x88] sm:$0xff]
    %v754 = vld [vmem:[#allocation4 + $0x90] sm:$0xff]
    %v755 = vld [vmem:[#allocation4 + $0x98] sm:$0xff]
    %v756 = vld [vmem:[#allocation4 + $0xa0] sm:$0xff]
    %v757 = vld [vmem:[#allocation4 + $0xa8] sm:$0xff]
    %v758 = vld [vmem:[#allocation4 + $0xb0] sm:$0xff]
    %v759 = vld [vmem:[#allocation4 + $0xb8] sm:$0xff]
    %v760 = vld [vmem:[#allocation4 + $0xc0] sm:$0xff]
    %v761 = vld [vmem:[#allocation4 + $0xc8] sm:$0xff]
    %v762 = vld [vmem:[#allocation4 + $0xd0] sm:$0xff]
    %v763 = vld [vmem:[#allocation4 + $0xd8] sm:$0xff]
    %v764 = vld [vmem:[#allocation4 + $0xe0] sm:$0xff]
    %v765 = vld [vmem:[#allocation4 + $0xe8] sm:$0xff]
    %v766 = vld [vmem:[#allocation4 + $0xf0] sm:$0xff]
    %v767 = vld [vmem:[#allocation4 + $0xf8] sm:$0xff]
    %v768 = vld [vmem:[#allocation2 + $0x140] sm:$0xf]
    %v769 = vld [vmem:[#allocation2 + $0x144] sm:$0xf]
    %v770 = vld [vmem:[#allocation2 + $0x148] sm:$0xf]
    %v771 = vld [vmem:[#allocation2 + $0x14c] sm:$0xf]
    %v772 = vld [vmem:[#allocation2 + $0x150] sm:$0xf]
    %v773 = vld [vmem:[#allocation2 + $0x154] sm:$0xf]
    %v774 = vld [vmem:[#allocation2 + $0x158] sm:$0xf]
    %v775 = vld [vmem:[#allocation2 + $0x15c] sm:$0xf]
    %v776 = vld [vmem:[#allocation2 + $0x160] sm:$0xf]
    %v777 = vld [vmem:[#allocation2 + $0x164] sm:$0xf]
    %v778 = vld [vmem:[#allocation2 + $0x168] sm:$0xf]
    %v779 = vld [vmem:[#allocation2 + $0x16c] sm:$0xf]
    %v780 = vld [vmem:[#allocation2 + $0x170] sm:$0xf]
    %v781 = vld [vmem:[#allocation2 + $0x174] sm:$0xf]
    %v782 = vld [vmem:[#allocation2 + $0x178] sm:$0xf]
    %v783 = vld [vmem:[#allocation2 + $0x17c] sm:$0xf]
    %v784 = vld [vmem:[#allocation2 + $0x180] sm:$0xf]
    %v785 = vld [vmem:[#allocation2 + $0x184] sm:$0xf]
    %v786 = vld [vmem:[#allocation2 + $0x188] sm:$0xf]
    %v787 = vld [vmem:[#allocation2 + $0x18c] sm:$0xf]
    %v788 = vld [vmem:[#allocation2 + $0x190] sm:$0xf]
    %v789 = vld [vmem:[#allocation2 + $0x194] sm:$0xf]
    %v790 = vld [vmem:[#allocation2 + $0x198] sm:$0xf]
    %v791 = vld [vmem:[#allocation2 + $0x19c] sm:$0xf]
    %v792 = vld [vmem:[#allocation2 + $0x1a0] sm:$0xf]
    %v793 = vld [vmem:[#allocation2 + $0x1a4] sm:$0xf]
    %v794 = vld [vmem:[#allocation2 + $0x1a8] sm:$0xf]
    %v795 = vld [vmem:[#allocation2 + $0x1ac] sm:$0xf]
    %v796 = vld [vmem:[#allocation2 + $0x1b0] sm:$0xf]
    %v797 = vld [vmem:[#allocation2 + $0x1b4] sm:$0xf]
    %v798 = vld [vmem:[#allocation2 + $0x1b8] sm:$0xf]
    %v799 = vld [vmem:[#allocation2 + $0x1bc] sm:$0xf]
    %s800 = scalar_lea.vmem %s4, 3
    %v801 = vld [vmem:[%s800] ss:$8 sm:$0x3]
    %s802 = scalar_lea.vmem %s4, 4
    %v803 = vld [vmem:[%s802] ss:$8 sm:$0x3]
    %s804 = scalar_lea.vmem %s4, 5
    %v805 = vld [vmem:[%s804] ss:$8 sm:$0x3]
    %v806 = vld [vmem:[%s3 + $0x6] sm:$0x1]
    %v807 = vld [vmem:[%s3 + $0x7] sm:$0x1]
    %v808 = vld [vmem:[%s3 + $0x8] sm:$0x1]
    %v809 = vpack.c.bf16 %v751, %v750
    %v811 = vlaneseq
    %v812 = vshrl.u32 %v811, 7
    %v813 = vsub.s32 0, %v812
    %v814 = vrot.slane %v801, %v813
    %v815 = vlaneseq
    %v816 = vshrl.u32 %v815, 7
    %v817 = vsub.s32 1, %v816
    %v818 = vrot.slane %v801, %v817
    %v837 = vunpack.c.l.b16 %v752
    %v838 = vunpack.c.h.b16 %v752
    %v839 = vunpack.c.l.b16 %v753
    %v840 = vunpack.c.h.b16 %v753
    %v841 = vunpack.c.l.b16 %v754
    %v842 = vunpack.c.h.b16 %v754
    %v843 = vunpack.c.l.b16 %v755
    %v844 = vunpack.c.h.b16 %v755
    %v845 = vunpack.c.l.b16 %v756
    %v846 = vunpack.c.h.b16 %v756
    %v847 = vunpack.c.l.b16 %v757
    %v848 = vunpack.c.h.b16 %v757
    %v849 = vunpack.c.l.b16 %v758
    %v850 = vunpack.c.h.b16 %v758
    %v851 = vunpack.c.l.b16 %v759
    %v852 = vunpack.c.h.b16 %v759
    %v853 = vunpack.c.l.b16 %v760
    %v854 = vunpack.c.h.b16 %v760
    %v855 = vunpack.c.l.b16 %v761
    %v856 = vunpack.c.h.b16 %v761
    %v857 = vunpack.c.l.b16 %v762
    %v858 = vunpack.c.h.b16 %v762
    %v859 = vunpack.c.l.b16 %v763
    %v860 = vunpack.c.h.b16 %v763
    %v861 = vunpack.c.l.b16 %v764
    %v862 = vunpack.c.h.b16 %v764
    %v863 = vunpack.c.l.b16 %v765
    %v864 = vunpack.c.h.b16 %v765
    %v865 = vunpack.c.l.b16 %v766
    %v866 = vunpack.c.h.b16 %v766
    %v867 = vunpack.c.l.b16 %v767
    %v868 = vunpack.c.h.b16 %v767
    %v869 = vpack.c.b16 %v839, %v837
    %v870 = vpack.c.b16 %v840, %v838
    %v871 = vpack.c.b16 %v843, %v841
    %v872 = vpack.c.b16 %v844, %v842
    %v873 = vpack.c.b16 %v847, %v845
    %v874 = vpack.c.b16 %v848, %v846
    %v875 = vpack.c.b16 %v851, %v849
    %v876 = vpack.c.b16 %v852, %v850
    %v877 = vpack.c.b16 %v855, %v853
    %v878 = vpack.c.b16 %v856, %v854
    %v879 = vpack.c.b16 %v859, %v857
    %v880 = vpack.c.b16 %v860, %v858
    %v881 = vpack.c.b16 %v863, %v861
    %v882 = vpack.c.b16 %v864, %v862
    %v883 = vpack.c.b16 %v867, %v865
    %v884 = vpack.c.b16 %v868, %v866
    %901 = vmatprep.subr.bf16.mxu0 %v870
    %902 = vmatpush1.bf16.msra.mxu0 %v869
    %903 = vmatprep.subr.bf16.mxu0 %v872
    %904 = vmatpush1.bf16.msra.mxu0 %v871
    %905 = vmatprep.subr.bf16.mxu0 %v874
    %906 = vmatpush1.bf16.msra.mxu0 %v873
    %907 = vmatprep.subr.bf16.mxu0 %v876
    %908 = vmatpush1.bf16.msra.mxu0 %v875
    %909 = vmatprep.subr.bf16.mxu0 %v878
    %910 = vmatpush1.bf16.msra.mxu0 %v877
    %911 = vmatprep.subr.bf16.mxu0 %v880
    %912 = vmatpush1.bf16.msra.mxu0 %v879
    %913 = vmatprep.subr.bf16.mxu0 %v882
    %914 = vmatpush1.bf16.msra.mxu0 %v881
    %915 = vmatprep.subr.bf16.mxu0 %v884
    %916 = vmatpush1.bf16.msra.mxu0 %v883
    %917 = vmatprep.subr.bf16.mxu0 0
    %918 = vmatpush1.bf16.msra.mxu0 0
    %919 = vmatprep.subr.bf16.mxu0 0
    %920 = vmatpush1.bf16.msra.mxu0 0
    %921 = vmatprep.subr.bf16.mxu0 0
    %922 = vmatpush1.bf16.msra.mxu0 0
    %923 = vmatprep.subr.bf16.mxu0 0
    %924 = vmatpush1.bf16.msra.mxu0 0
    %925 = vmatprep.subr.bf16.mxu0 0
    %926 = vmatpush1.bf16.msra.mxu0 0
    %927 = vmatprep.subr.bf16.mxu0 0
    %928 = vmatpush1.bf16.msra.mxu0 0
    %929 = vmatprep.subr.bf16.mxu0 0
    %930 = vmatpush1.bf16.msra.mxu0 0
    %931 = vmatprep.subr.bf16.mxu0 0
    %932 = vmatpush1.bf16.msra.mxu0 0
    %933 = vmatprep.mubr.bf16.mxu0 0
    %934 = vmatmul.mubr.bf16.gmra.mrb[0].mxu0 %v809
    %v935 = vpop.f32.mrb[0].mxu0
    %v936 = vadd.f32 %v814, %v935
    %v937 = vpop.f32.mrb[0].mxu0
    %v938 = vadd.f32 %v818, %v937
    %v939 = vpop.f32.mrb[0].mxu0
    %v940 = vadd.f32 %v814, %v939
    %v941 = vpop.f32.mrb[0].mxu0
    %v942 = vadd.f32 %v818, %v941
    %943 = vdwg.mxu0
    %v944 = vadd.f32 %v936, %v938
    %945 = vadd.xlane.f32.xlu0 %v944
    %v946 = vpop.xlane.xlu0 %945
    %v947 = vadd.f32 %v940, %v942
    %948 = vadd.xlane.f32.xlu0 %v947
    %v949 = vpop.xlane.xlu0 %948
    %v950 = vmul.f32 %v946, 0.00390625
    %v951 = vmul.f32 %v949, 0.00390625
    %v952 = vmul.f32 %v936, %v936
    %v953 = vmul.f32 %v938, %v938
    %v954 = vmul.f32 %v940, %v940
    %v955 = vmul.f32 %v942, %v942
    %v956 = vadd.f32 %v952, %v953
    %957 = vadd.xlane.f32.xlu0 %v956
    %v958 = vpop.xlane.xlu0 %957
    %v959 = vadd.f32 %v954, %v955
    %960 = vadd.xlane.f32.xlu0 %v959
    %v961 = vpop.xlane.xlu0 %960
    %v962 = vmul.f32 %v958, 0.00390625
    %v963 = vmul.f32 %v961, 0.00390625
    %v964 = vmul.f32 %v950, %v950
    %v965 = vmul.f32 %v951, %v951
    %v966 = vsub.f32 %v962, %v964
    %v967 = vsub.f32 %v963, %v965
    %v968 = vmax.f32 %v966, 0.0
    %v969 = vmax.f32 %v967, 0.0
    %v970 = vsub.f32 %v936, %v950
    %v971 = vsub.f32 %v938, %v950
    %v972 = vsub.f32 %v940, %v951
    %v973 = vsub.f32 %v942, %v951
    %v974 = vadd.f32 %v968, 1e-05
    %v975 = vadd.f32 %v969, 1e-05
    %v976 = vrsqrt.pop %v974
    %v977 = vrsqrt.pop %v975
    %v978 = vmul.f32 %v970, %v976
    %v979 = vmul.f32 %v971, %v976
    %v980 = vmul.f32 %v972, %v977
    %v981 = vmul.f32 %v973, %v977
    %v983 = vlaneseq
    %v984 = vshrl.u32 %v983, 7
    %v985 = vsub.s32 0, %v984
    %v986 = vrot.slane %v803, %v985
    %v987 = vlaneseq
    %v988 = vshrl.u32 %v987, 7
    %v989 = vsub.s32 1, %v988
    %v990 = vrot.slane %v803, %v989
    %v993 = vmul.f32 %v978, %v986
    %v994 = vmul.f32 %v979, %v990
    %v995 = vmul.f32 %v980, %v986
    %v996 = vmul.f32 %v981, %v990
    %v998 = vlaneseq
    %v999 = vshrl.u32 %v998, 7
    %v1000 = vsub.s32 0, %v999
    %v1001 = vrot.slane %v805, %v1000
    %v1002 = vlaneseq
    %v1003 = vshrl.u32 %v1002, 7
    %v1004 = vsub.s32 1, %v1003
    %v1005 = vrot.slane %v805, %v1004
    %v1008 = vadd.f32 %v993, %v1001
    %v1009 = vadd.f32 %v994, %v1005
    %v1010 = vadd.f32 %v995, %v1001
    %v1011 = vadd.f32 %v996, %v1005
    %vm1012 = vcmp.ge.f32.partialorder %v1008, 0.0
    %vm1013 = vcmp.ge.f32.partialorder %v1009, 0.0
    %vm1014 = vcmp.ge.f32.partialorder %v1010, 0.0
    %vm1015 = vcmp.ge.f32.partialorder %v1011, 0.0
    %v1016 = vmul.f32 %v1008, 0.01
    %v1017 = vmul.f32 %v1009, 0.01
    %v1018 = vmul.f32 %v1010, 0.01
    %v1019 = vmul.f32 %v1011, 0.01
    %v1020 = vsel %vm1012, %v1008, %v1016
    %v1021 = vsel %vm1013, %v1009, %v1017
    %v1022 = vsel %vm1014, %v1010, %v1018
    %v1023 = vsel %vm1015, %v1011, %v1019
    %v1024 = vpack.c.bf16 %v1022, %v1020
    %v1025 = vpack.c.bf16 %v1023, %v1021
    %v1026 = vlaneseq
    %v1027 = vshrl.u32 %v1026, 7
    %v1028 = vsub.s32 0, %v1027
    %v1029 = vrot.slane %v806, %v1028
    %v1062 = vunpack.c.l.b16 %v768
    %v1063 = vunpack.c.l.b16 %v769
    %v1064 = vunpack.c.l.b16 %v770
    %v1065 = vunpack.c.l.b16 %v771
    %v1066 = vunpack.c.l.b16 %v772
    %v1067 = vunpack.c.l.b16 %v773
    %v1068 = vunpack.c.l.b16 %v774
    %v1069 = vunpack.c.l.b16 %v775
    %v1070 = vunpack.c.l.b16 %v776
    %v1071 = vunpack.c.l.b16 %v777
    %v1072 = vunpack.c.l.b16 %v778
    %v1073 = vunpack.c.l.b16 %v779
    %v1074 = vunpack.c.l.b16 %v780
    %v1075 = vunpack.c.l.b16 %v781
    %v1076 = vunpack.c.l.b16 %v782
    %v1077 = vunpack.c.l.b16 %v783
    %v1078 = vunpack.c.l.b16 %v784
    %v1079 = vunpack.c.l.b16 %v785
    %v1080 = vunpack.c.l.b16 %v786
    %v1081 = vunpack.c.l.b16 %v787
    %v1082 = vunpack.c.l.b16 %v788
    %v1083 = vunpack.c.l.b16 %v789
    %v1084 = vunpack.c.l.b16 %v790
    %v1085 = vunpack.c.l.b16 %v791
    %v1086 = vunpack.c.l.b16 %v792
    %v1087 = vunpack.c.l.b16 %v793
    %v1088 = vunpack.c.l.b16 %v794
    %v1089 = vunpack.c.l.b16 %v795
    %v1090 = vunpack.c.l.b16 %v796
    %v1091 = vunpack.c.l.b16 %v797
    %v1092 = vunpack.c.l.b16 %v798
    %v1093 = vunpack.c.l.b16 %v799
    %v1094 = vpack.c.b16 %v1063, %v1062
    %v1095 = vpack.c.b16 %v1065, %v1064
    %v1096 = vpack.c.b16 %v1067, %v1066
    %v1097 = vpack.c.b16 %v1069, %v1068
    %v1098 = vpack.c.b16 %v1071, %v1070
    %v1099 = vpack.c.b16 %v1073, %v1072
    %v1100 = vpack.c.b16 %v1075, %v1074
    %v1101 = vpack.c.b16 %v1077, %v1076
    %v1102 = vpack.c.b16 %v1079, %v1078
    %v1103 = vpack.c.b16 %v1081, %v1080
    %v1104 = vpack.c.b16 %v1083, %v1082
    %v1105 = vpack.c.b16 %v1085, %v1084
    %v1106 = vpack.c.b16 %v1087, %v1086
    %v1107 = vpack.c.b16 %v1089, %v1088
    %v1108 = vpack.c.b16 %v1091, %v1090
    %v1109 = vpack.c.b16 %v1093, %v1092
    %1126 = vmatprep.subr.bf16.mxu0 0
    %1127 = vmatpush1.bf16.msra.mxu0 %v1094
    %1128 = vmatprep.subr.bf16.mxu0 0
    %1129 = vmatpush1.bf16.msra.mxu0 %v1095
    %1130 = vmatprep.subr.bf16.mxu0 0
    %1131 = vmatpush1.bf16.msra.mxu0 %v1096
    %1132 = vmatprep.subr.bf16.mxu0 0
    %1133 = vmatpush1.bf16.msra.mxu0 %v1097
    %1134 = vmatprep.subr.bf16.mxu0 0
    %1135 = vmatpush1.bf16.msra.mxu0 %v1098
    %1136 = vmatprep.subr.bf16.mxu0 0
    %1137 = vmatpush1.bf16.msra.mxu0 %v1099
    %1138 = vmatprep.subr.bf16.mxu0 0
    %1139 = vmatpush1.bf16.msra.mxu0 %v1100
    %1140 = vmatprep.subr.bf16.mxu0 0
    %1141 = vmatpush1.bf16.msra.mxu0 %v1101
    %1142 = vmatprep.subr.bf16.mxu0 0
    %1143 = vmatpush1.bf16.msra.mxu0 %v1102
    %1144 = vmatprep.subr.bf16.mxu0 0
    %1145 = vmatpush1.bf16.msra.mxu0 %v1103
    %1146 = vmatprep.subr.bf16.mxu0 0
    %1147 = vmatpush1.bf16.msra.mxu0 %v1104
    %1148 = vmatprep.subr.bf16.mxu0 0
    %1149 = vmatpush1.bf16.msra.mxu0 %v1105
    %1150 = vmatprep.subr.bf16.mxu0 0
    %1151 = vmatpush1.bf16.msra.mxu0 %v1106
    %1152 = vmatprep.subr.bf16.mxu0 0
    %1153 = vmatpush1.bf16.msra.mxu0 %v1107
    %1154 = vmatprep.subr.bf16.mxu0 0
    %1155 = vmatpush1.bf16.msra.mxu0 %v1108
    %1156 = vmatprep.subr.bf16.mxu0 0
    %1157 = vmatpush1.bf16.msra.mxu0 %v1109
    %1158 = vmatprep.mubr.bf16.mxu0 %v1025
    %1159 = vmatmul.mubr.bf16.gmra.mrb[0].mxu0 %v1024
    %v1160 = vpop.f32.mrb[0].mxu0
    %v1161 = vadd.f32 %v1029, %v1160
    %v1162 = vpop.f32.mrb[0].mxu0
    %v1163 = vpop.f32.mrb[0].mxu0
    %v1164 = vadd.f32 %v1029, %v1163
    %v1165 = vpop.f32.mrb[0].mxu0
    %1166 = vdwg.mxu0
    %1167 = vadd.xlane.f32.xlu0 %v1161
    %v1168 = vpop.xlane.xlu0 %1167
    %1169 = vadd.xlane.f32.xlu0 %v1164
    %v1170 = vpop.xlane.xlu0 %1169
    %v1171 = vmul.f32 %v1168, 0.0078125
    %v1172 = vmul.f32 %v1170, 0.0078125
    %v1173 = vmul.f32 %v1161, %v1161
    %v1174 = vmul.f32 %v1164, %v1164
    %1175 = vadd.xlane.f32.xlu0 %v1173
    %v1176 = vpop.xlane.xlu0 %1175
    %1177 = vadd.xlane.f32.xlu0 %v1174
    %v1178 = vpop.xlane.xlu0 %1177
    %v1179 = vmul.f32 %v1176, 0.0078125
    %v1180 = vmul.f32 %v1178, 0.0078125
    %v1181 = vmul.f32 %v1171, %v1171
    %v1182 = vmul.f32 %v1172, %v1172
    %v1183 = vsub.f32 %v1179, %v1181
    %v1184 = vsub.f32 %v1180, %v1182
    %v1185 = vmax.f32 %v1183, 0.0
    %v1186 = vmax.f32 %v1184, 0.0
    %v1187 = vsub.f32 %v1161, %v1171
    %v1188 = vsub.f32 %v1164, %v1172
    %v1189 = vadd.f32 %v1185, 1e-05
    %v1190 = vadd.f32 %v1186, 1e-05
    %v1191 = vrsqrt.pop %v1189
    %v1192 = vrsqrt.pop %v1190
    %v1193 = vmul.f32 %v1187, %v1191
    %v1194 = vmul.f32 %v1188, %v1192
    %v1195 = vlaneseq
    %v1196 = vshrl.u32 %v1195, 7
    %v1197 = vsub.s32 0, %v1196
    %v1198 = vrot.slane %v807, %v1197
    %v1199 = vmul.f32 %v1193, %v1198
    %v1200 = vmul.f32 %v1194, %v1198
    %v1201 = vlaneseq
    %v1202 = vshrl.u32 %v1201, 7
    %v1203 = vsub.s32 0, %v1202
    %v1204 = vrot.slane %v808, %v1203
    %v1205 = vadd.f32 %v1199, %v1204
    %v1206 = vadd.f32 %v1200, %v1204
    %v1207 = vadd.f32 %v750, %v1205
    %v1208 = vadd.f32 %v751, %v1206
    %v1209 = vpack.c.bf16 %v1208, %v1207
    %v1210 = vlaneseq
    %v1211 = vshrl.u32 %v1210, 7
    %v1212 = vsub.s32 0, %v1211
    %v1213 = vrot.slane %v99, %v1212
    %v1230 = vunpack.c.l.b16 %v81
    %v1231 = vunpack.c.l.b16 %v82
    %v1232 = vunpack.c.l.b16 %v83
    %v1233 = vunpack.c.l.b16 %v84
    %v1234 = vunpack.c.l.b16 %v85
    %v1235 = vunpack.c.l.b16 %v86
    %v1236 = vunpack.c.l.b16 %v87
    %v1237 = vunpack.c.l.b16 %v88
    %v1238 = vunpack.c.l.b16 %v89
    %v1239 = vunpack.c.l.b16 %v90
    %v1240 = vunpack.c.l.b16 %v91
    %v1241 = vunpack.c.l.b16 %v92
    %v1242 = vunpack.c.l.b16 %v93
    %v1243 = vunpack.c.l.b16 %v94
    %v1244 = vunpack.c.l.b16 %v95
    %v1245 = vunpack.c.l.b16 %v96
    %v1246 = vpack.c.b16 %v1231, %v1230
    %v1247 = vpack.c.b16 %v1233, %v1232
    %v1248 = vpack.c.b16 %v1235, %v1234
    %v1249 = vpack.c.b16 %v1237, %v1236
    %v1250 = vpack.c.b16 %v1239, %v1238
    %v1251 = vpack.c.b16 %v1241, %v1240
    %v1252 = vpack.c.b16 %v1243, %v1242
    %v1253 = vpack.c.b16 %v1245, %v1244
    %1262 = vmatprep.subr.bf16.mxu0 0
    %1263 = vmatpush1.bf16.msra.mxu0 %v1246
    %1264 = vmatprep.subr.bf16.mxu0 0
    %1265 = vmatpush1.bf16.msra.mxu0 %v1247
    %1266 = vmatprep.subr.bf16.mxu0 0
    %1267 = vmatpush1.bf16.msra.mxu0 %v1248
    %1268 = vmatprep.subr.bf16.mxu0 0
    %1269 = vmatpush1.bf16.msra.mxu0 %v1249
    %1270 = vmatprep.subr.bf16.mxu0 0
    %1271 = vmatpush1.bf16.msra.mxu0 %v1250
    %1272 = vmatprep.subr.bf16.mxu0 0
    %1273 = vmatpush1.bf16.msra.mxu0 %v1251
    %1274 = vmatprep.subr.bf16.mxu0 0
    %1275 = vmatpush1.bf16.msra.mxu0 %v1252
    %1276 = vmatprep.subr.bf16.mxu0 0
    %1277 = vmatpush1.bf16.msra.mxu0 %v1253
    %1278 = vmatprep.subr.bf16.mxu0 0
    %1279 = vmatpush1.bf16.msra.mxu0 0
    %1280 = vmatprep.subr.bf16.mxu0 0
    %1281 = vmatpush1.bf16.msra.mxu0 0
    %1282 = vmatprep.subr.bf16.mxu0 0
    %1283 = vmatpush1.bf16.msra.mxu0 0
    %1284 = vmatprep.subr.bf16.mxu0 0
    %1285 = vmatpush1.bf16.msra.mxu0 0
    %1286 = vmatprep.subr.bf16.mxu0 0
    %1287 = vmatpush1.bf16.msra.mxu0 0
    %1288 = vmatprep.subr.bf16.mxu0 0
    %1289 = vmatpush1.bf16.msra.mxu0 0
    %1290 = vmatprep.subr.bf16.mxu0 0
    %1291 = vmatpush1.bf16.msra.mxu0 0
    %1292 = vmatprep.subr.bf16.mxu0 0
    %1293 = vmatpush1.bf16.msra.mxu0 0
    %1294 = vmatprep.mubr.bf16.mxu0 0
    %1295 = vmatmul.mubr.bf16.gmra.mrb[0].mxu0 %v1209
    %v1296 = vpop.f32.mrb[0].mxu0
    %v1297 = vadd.f32 %v1213, %v1296
    %v1298 = vpop.f32.mrb[0].mxu0
    %v1299 = vpop.f32.mrb[0].mxu0
    %v1300 = vadd.f32 %v1213, %v1299
    %v1301 = vpop.f32.mrb[0].mxu0
    %1302 = vdwg.mxu0
    %1303 = vst [vmem:[%s5] sm:$0xff] %v1297
    %1304 = vst [vmem:[%s5 + $0x8] sm:$0xff] %v1300
    // Predicated region
    $region30: #{residual_actor_forward.1} parent=1 // pred_check
      _
    $region31: #{residual_actor_forward.1} parent=1 // pred_check_branch
      %1306 = sbr.rel (0) target = $region33
    $region32: #{residual_actor_forward.1} parent=1 // pred_region
      _
    $region33: #{residual_actor_forward.1} parent=1 // pred_fallthru
      _
    // Predicated region
    $region34: #{residual_actor_forward.1} parent=1 // pred_check
      _
    $region35: #{residual_actor_forward.1} parent=1 // pred_check_branch
      %1308 = sbr.rel (0) target = $region37
    $region36: #{residual_actor_forward.1} parent=1 // pred_region
      _
    $region37: #{residual_actor_forward.1} parent=1 // pred_fallthru
      _
    %1309 = vsyncpa [#allocation3], 1
    %1310 = vsyncpa [#allocation5], 1

</llo_original>
